<compile_context>
chip_gen: v5e
topology: v5e:2x2
jax: 0.10.0
libtpu: 0.0.40
codegen_flags: <defaults>
</compile_context>

<pallas_src>
import functools

import jax
import jax.numpy as jnp
from jax.experimental import pallas as pl
from jax.experimental.pallas import tpu as pltpu


def _round_up(x, m):
    return (x + m - 1) // m * m


# ----------------------------------------------------------------------------
# Pallas kernels (transposed GEMM + per-channel affine [+ residual] [+ leaky])
# ----------------------------------------------------------------------------
def _conv_kernel(w_ref, sc_ref, sh_ref, p_ref, o_ref, *, leaky: bool):
    # (Cout, K) @ (K, TILE_M) -> (Cout, TILE_M); M (lanes) is dense.
    acc = jnp.dot(w_ref[...], p_ref[...], preferred_element_type=jnp.float32)
    acc = acc * sc_ref[...] + sh_ref[...]          # per-Cout affine, lane-bcast
    if leaky:
        acc = jnp.where(acc > 0, acc, 0.2 * acc)
    o_ref[...] = acc


def _conv_res_kernel(w_ref, sc_ref, sh_ref, p_ref, r_ref, o_ref):
    # conv -> BN(affine) -> + residual -> LeakyReLU(0.2)
    acc = jnp.dot(w_ref[...], p_ref[...], preferred_element_type=jnp.float32)
    acc = acc * sc_ref[...] + sh_ref[...] + r_ref[...]
    o_ref[...] = jnp.where(acc > 0, acc, 0.2 * acc)


# ----------------------------------------------------------------------------
# Fused conv (+ affine + optional residual + optional LeakyReLU)
# Activations live in channels-leading layout: x_t (C, B, H, W).
# ----------------------------------------------------------------------------
def pallas_conv(x_t, w_hwio, scale, shift, *, stride, pad, residual_t=None,
                leaky=False, mxu_dtype=jnp.bfloat16):
    C, B, H, W = x_t.shape
    kh, kw, cin, Cout = w_hwio.shape
    assert cin == C
    Ho = (H + 2 * pad - kh) // stride + 1
    Wo = (W + 2 * pad - kw) // stride + 1
    M = B * Ho * Wo
    K = kh * kw * C

    # ---- glue: transposed im2col -> P_t (K, M) ------------------------------
    # TODO(synk): fuse patch formation into the kernel (halo'd tiles) so the
    #             k^2-expanded matrix never hits HBM.
    xp = jnp.pad(x_t, ((0, 0), (0, 0), (pad, pad), (pad, pad)))
    taps = []
    for di in range(kh):
        for dj in range(kw):
            taps.append(
                xp[:, :, di:di + stride * (Ho - 1) + 1:stride,
                         dj:dj + stride * (Wo - 1) + 1:stride])
    p_t = jnp.stack(taps, axis=0).reshape(K, M)                 # (K, M)
    w_t = jnp.transpose(w_hwio, (3, 0, 1, 2)).reshape(Cout, K)  # (Cout, K)

    # ---- padding / tiling ---------------------------------------------------
    K_pad = _round_up(K, 32)                     # sublane-aligned contraction
    TILE_M = min(1024, _round_up(M, 128))        # lane-dense, v7x-VMEM safe
    M_pad = _round_up(M, TILE_M)

    p_t = jnp.pad(p_t, ((0, K_pad - K), (0, M_pad - M))).astype(mxu_dtype)
    w_t = jnp.pad(w_t, ((0, 0), (0, K_pad - K))).astype(mxu_dtype)
    sc = scale.reshape(Cout, 1).astype(jnp.float32)
    sh = shift.reshape(Cout, 1).astype(jnp.float32)

    resident = lambda shape: pl.BlockSpec(shape, lambda i: (0, 0))
    tiled = lambda rows: pl.BlockSpec((rows, TILE_M), lambda i: (0, i))

    in_specs = [resident((Cout, K_pad)), resident((Cout, 1)),
                resident((Cout, 1)), tiled(K_pad)]
    args = [w_t, sc, sh, p_t]
    if residual_t is not None:
        r_t = residual_t.reshape(Cout, M).astype(jnp.float32)
        r_t = jnp.pad(r_t, ((0, 0), (0, M_pad - M)))
        in_specs.append(tiled(Cout))
        args.append(r_t)
        kernel = _conv_res_kernel
    else:
        kernel = functools.partial(_conv_kernel, leaky=leaky)

    itemsize = jnp.dtype(mxu_dtype).itemsize
    bytes_accessed = (K_pad * M_pad * itemsize          # patches
                      + Cout * K_pad * itemsize         # weights
                      + Cout * M_pad * 4                # output
                      + (Cout * M_pad * 4 if residual_t is not None else 0))
    cost = pl.CostEstimate(flops=2 * M_pad * K_pad * Cout,
                           transcendentals=0,
                           bytes_accessed=bytes_accessed)

    # VMEM budget: double-buffered streaming tiles + resident weights + margin.
    vmem_bytes = 2 * (K_pad * TILE_M * itemsize
                      + Cout * TILE_M * 4
                      + (Cout * TILE_M * 4 if residual_t is not None else 0))
    vmem_bytes += Cout * K_pad * itemsize
    vmem_bytes = int(min(max(2 * vmem_bytes, 16 << 20), 60 << 20))  # v7x-safe

    out = pl.pallas_call(
        kernel,
        out_shape=jax.ShapeDtypeStruct((Cout, M_pad), jnp.float32),
        grid=(pl.cdiv(M_pad, TILE_M),),
        in_specs=in_specs,
        out_specs=pl.BlockSpec((Cout, TILE_M), lambda i: (0, i)),
        compiler_params=pltpu.CompilerParams(
            dimension_semantics=("parallel",),
            vmem_limit_bytes=vmem_bytes),
        cost_estimate=cost,
    )(*args)

    return out[:, :M].reshape(Cout, B, Ho, Wo)


# ----------------------------------------------------------------------------
# Parameters (deterministic, synthetic) + eval-mode BN folding
# ----------------------------------------------------------------------------
def _fold_bn(bn, eps=1e-5):
    gamma, beta, mean, var = bn
    s = gamma / jnp.sqrt(var + eps)
    return s, beta - mean * s


def init_params(key, in_channels, out_channels, k_down):
    keys = iter(jax.random.split(key, 256))
    nk = lambda: next(keys)
    p = {}
    cin = in_channels
    for i in range(k_down):
        p[f"down_{i}"] = {
            "w": 0.05 * jax.random.normal(nk(), (5, 5, cin, out_channels), jnp.float32),
            "b": 0.1 * jax.random.normal(nk(), (out_channels,), jnp.float32),
        }
        cin = out_channels
    for i in range(6):
        p[f"res_{i}"] = {
            "w1": 0.05 * jax.random.normal(nk(), (3, 3, out_channels, out_channels), jnp.float32),
            "bn1": (1.0 + 0.1 * jax.random.normal(nk(), (out_channels,), jnp.float32),
                    0.1 * jax.random.normal(nk(), (out_channels,), jnp.float32),
                    0.1 * jax.random.normal(nk(), (out_channels,), jnp.float32),
                    1.0 + 0.1 * jax.random.uniform(nk(), (out_channels,), jnp.float32)),
            "w2": 0.05 * jax.random.normal(nk(), (3, 3, out_channels, out_channels), jnp.float32),
            "bn2": (1.0 + 0.1 * jax.random.normal(nk(), (out_channels,), jnp.float32),
                    0.1 * jax.random.normal(nk(), (out_channels,), jnp.float32),
                    0.1 * jax.random.normal(nk(), (out_channels,), jnp.float32),
                    1.0 + 0.1 * jax.random.uniform(nk(), (out_channels,), jnp.float32)),
        }
    # segment_2_conv_0: hardcoded 32->32 in the PyTorch module
    p["final"] = {
        "w": 0.05 * jax.random.normal(nk(), (3, 3, 32, 32), jnp.float32),
        "b": 0.1 * jax.random.normal(nk(), (32,), jnp.float32),
    }
    return p


# ----------------------------------------------------------------------------
# FeatureExtractor forward (Pallas) and pure-JAX reference (both NCHW I/O)
# ----------------------------------------------------------------------------
def feature_extractor_pallas(x_nchw, params, k_down, out_channels,
                             mxu_dtype=jnp.bfloat16):
    ones = jnp.ones((out_channels,), jnp.float32)
    h = jnp.transpose(x_nchw, (1, 0, 2, 3))                 # (C, B, H, W)
    # segment 0: k downsampling convs (kernel 5, stride 2, pad 2, bias)
    for i in range(k_down):
        q = params[f"down_{i}"]
        h = pallas_conv(h, q["w"], ones, q["b"], stride=2, pad=2,
                        leaky=False, mxu_dtype=mxu_dtype)
    # segment 1: 6 residual blocks
    for i in range(6):
        q = params[f"res_{i}"]
        s1, b1 = _fold_bn(q["bn1"])
        s2, b2 = _fold_bn(q["bn2"])
        h1 = pallas_conv(h, q["w1"], s1, b1, stride=1, pad=1, leaky=True,
                         mxu_dtype=mxu_dtype)
        # TODO(synk): fuse both ResBlock convs (+residual) into a single kernel
        #             so h1 never round-trips HBM.
        h = pallas_conv(h1, q["w2"], s2, b2, stride=1, pad=1, residual_t=h,
                        leaky=True, mxu_dtype=mxu_dtype)
    # segment 2: final 3x3 conv, bias, no activation
    q = params["final"]
    h = pallas_conv(h, q["w"], jnp.ones((32,), jnp.float32), q["b"],
                    stride=1, pad=1, leaky=False, mxu_dtype=mxu_dtype)
    return jnp.transpose(h, (1, 0, 2, 3))                   # (B, C, H, W)


def _ref_conv(x, w, scale, shift, stride, pad, residual=None, leaky=False,
              conv_dtype=jnp.float32):
    y = jax.lax.conv_general_dilated(
        x.astype(conv_dtype), w.astype(conv_dtype), (stride, stride),
        [(pad, pad), (pad, pad)],
        dimension_numbers=("NCHW", "HWIO", "NCHW"),
        preferred_element_type=jnp.float32)
    y = y * scale.reshape(1, -1, 1, 1) + shift.reshape(1, -1, 1, 1)
    if residual is not None:
        y = y + residual
    if leaky:
        y = jnp.where(y > 0, y, 0.2 * y)
    return y


def feature_extractor_ref(x_nchw, params, k_down, out_channels,
                          conv_dtype=jnp.float32):
    ones = jnp.ones((out_channels,), jnp.float32)
    h = x_nchw
    for i in range(k_down):
        q = params[f"down_{i}"]
        h = _ref_conv(h, q["w"], ones, q["b"], 2, 2, conv_dtype=conv_dtype)
    for i in range(6):
        q = params[f"res_{i}"]
        s1, b1 = _fold_bn(q["bn1"])
        s2, b2 = _fold_bn(q["bn2"])
        h1 = _ref_conv(h, q["w1"], s1, b1, 1, 1, leaky=True, conv_dtype=conv_dtype)
        h = _ref_conv(h1, q["w2"], s2, b2, 1, 1, residual=h, leaky=True,
                      conv_dtype=conv_dtype)
    q = params["final"]
    h = _ref_conv(h, q["w"], jnp.ones((32,), jnp.float32), q["b"], 1, 1,
                  conv_dtype=conv_dtype)
    return h


# ----------------------------------------------------------------------------
if __name__ == "__main__":
    B, Cin, H, W = 2, 4, 16, 16
    OUT_CH = 32          # must be 32 (segment_2 conv is hardcoded 32->32)
    K_DOWN = 2

    key = jax.random.PRNGKey(0)
    k_x, k_p = jax.random.split(key)
    x_nchw = jax.random.normal(k_x, (B, Cin, H, W), jnp.float32)
    params = init_params(k_p, Cin, OUT_CH, K_DOWN)

    fwd = jax.jit(feature_extractor_pallas,
                  static_argnames=("k_down", "out_channels", "mxu_dtype"))

    # 1) bf16-MXU path (production config) vs matched-precision XLA reference.
    out_bf16 = jax.block_until_ready(
        fwd(x_nchw, params, k_down=K_DOWN, out_channels=OUT_CH,
            mxu_dtype=jnp.bfloat16))
    ref_bf16 = jax.block_until_ready(
        feature_extractor_ref(x_nchw, params, K_DOWN, OUT_CH,
                              conv_dtype=jnp.bfloat16))
    assert out_bf16.shape == (B, OUT_CH, H // (2 ** K_DOWN), W // (2 ** K_DOWN)), \
        out_bf16.shape
    err_bf16 = float(jnp.max(jnp.abs(out_bf16 - ref_bf16)))

    # 2) f32-MXU path vs exact f32 reference (validates kernel logic exactly).
    out_f32 = jax.block_until_ready(
        fwd(x_nchw, params, k_down=K_DOWN, out_channels=OUT_CH,
            mxu_dtype=jnp.float32))
    ref_f32 = jax.block_until_ready(
        feature_extractor_ref(x_nchw, params, K_DOWN, OUT_CH,
                              conv_dtype=jnp.float32))
    err_f32 = float(jnp.max(jnp.abs(out_f32 - ref_f32)))

    if not (err_bf16 < 1e-3 and err_f32 < 1e-3):
        raise AssertionError(
            f"mismatch vs reference: bf16-path err={err_bf16}, f32-path err={err_f32}")

    print("KERNEL_OK")
</pallas_src>

<mosaic_0001>
module attributes {stable_mosaic.version = 11 : i64} {
  func.func @_conv_kernel(%arg0: i32, %arg1: memref<32x128xbf16, #tpu.memory_space<vmem>>, %arg2: memref<32x1xf32, #tpu.memory_space<vmem>>, %arg3: memref<32x1xf32, #tpu.memory_space<vmem>>, %arg4: memref<128x128xbf16, #tpu.memory_space<vmem>>, %arg5: memref<32x128xf32, #tpu.memory_space<vmem>>) attributes {dimension_semantics = [#tpu.dimension_semantics<parallel>], iteration_bounds = array<i64: 1>, scalar_prefetch = 0 : i64, scratch_operands = 0 : i64, tpu.core_type = #tpu.core_type<tc>, window_params = [{pipeline_mode = #tpu.pipeline_mode<synchronous>, transform_indices = @transform_0, window_bounds = array<i64: 32, 128>}, {pipeline_mode = #tpu.pipeline_mode<synchronous>, transform_indices = @transform_1, window_bounds = array<i64: 32, 1>}, {pipeline_mode = #tpu.pipeline_mode<synchronous>, transform_indices = @transform_2, window_bounds = array<i64: 32, 1>}, {transform_indices = @transform_3, window_bounds = array<i64: 128, 128>}, {transform_indices = @transform_4, window_bounds = array<i64: 32, 128>}]} {
    %c0 = arith.constant 0 : index
    %c0_0 = arith.constant 0 : index
    %0 = vector.load %arg1[%c0, %c0_0] : memref<32x128xbf16, #tpu.memory_space<vmem>>, vector<32x128xbf16>
    %c0_1 = arith.constant 0 : index
    %c0_2 = arith.constant 0 : index
    %1 = vector.load %arg4[%c0_1, %c0_2] : memref<128x128xbf16, #tpu.memory_space<vmem>>, vector<128x128xbf16>
    %cst = arith.constant dense<0.000000e+00> : vector<32x128xf32>
    %2 = tpu.matmul %0, %1, %cst {dimension_numbers = #tpu.dot_dimension_numbers<[1], [0], [0], [1], [0, 0, 1, 1], [], []>} : vector<32x128xbf16>, vector<128x128xbf16>, vector<32x128xf32> -> vector<32x128xf32>
    %c0_3 = arith.constant 0 : index
    %c0_4 = arith.constant 0 : index
    %3 = vector.load %arg2[%c0_3, %c0_4] : memref<32x1xf32, #tpu.memory_space<vmem>>, vector<32x1xf32>
    %4 = vector.broadcast %3 : vector<32x1xf32> to vector<32x128xf32>
    %5 = arith.mulf %2, %4 : vector<32x128xf32>
    %c0_5 = arith.constant 0 : index
    %c0_6 = arith.constant 0 : index
    %6 = vector.load %arg3[%c0_5, %c0_6] : memref<32x1xf32, #tpu.memory_space<vmem>>, vector<32x1xf32>
    %7 = vector.broadcast %6 : vector<32x1xf32> to vector<32x128xf32>
    %8 = arith.addf %5, %7 : vector<32x128xf32>
    %c0_7 = arith.constant 0 : index
    %c0_8 = arith.constant 0 : index
    %9 = vector.load %arg5[%c0_7, %c0_8] : memref<32x128xf32, #tpu.memory_space<vmem>>, vector<32x128xf32>
    tpu.vector_store %arg5[%c0_7, %c0_8], %8 {strides = array<i32>} : memref<32x128xf32, #tpu.memory_space<vmem>>, vector<32x128xf32>,
    return
  }
  func.func @transform_0(%arg0: i32) -> (i32, i32) {
    %c0_i32 = arith.constant 0 : i32
    %c0_i32_0 = arith.constant 0 : i32
    %c0_i32_1 = arith.constant 0 : i32
    return %c0_i32, %c0_i32_0 : i32, i32
  }
  func.func @transform_1(%arg0: i32) -> (i32, i32) {
    %c0_i32 = arith.constant 0 : i32
    %c0_i32_0 = arith.constant 0 : i32
    %c0_i32_1 = arith.constant 0 : i32
    return %c0_i32, %c0_i32_0 : i32, i32
  }
  func.func @transform_2(%arg0: i32) -> (i32, i32) {
    %c0_i32 = arith.constant 0 : i32
    %c0_i32_0 = arith.constant 0 : i32
    %c0_i32_1 = arith.constant 0 : i32
    return %c0_i32, %c0_i32_0 : i32, i32
  }
  func.func @transform_3(%arg0: i32) -> (i32, i32) {
    %c0_i32 = arith.constant 0 : i32
    %c0_i32_0 = arith.constant 0 : i32
    return %c0_i32, %arg0 : i32, i32
  }
  func.func @transform_4(%arg0: i32) -> (i32, i32) {
    %c0_i32 = arith.constant 0 : i32
    %c0_i32_0 = arith.constant 0 : i32
    return %c0_i32, %arg0 : i32, i32
  }
}

module attributes {stable_mosaic.version = 11 : i64} {
  func.func @_conv_kernel(%arg0: i32, %arg1: memref<32x800xbf16, #tpu.memory_space<vmem>>, %arg2: memref<32x1xf32, #tpu.memory_space<vmem>>, %arg3: memref<32x1xf32, #tpu.memory_space<vmem>>, %arg4: memref<800x128xbf16, #tpu.memory_space<vmem>>, %arg5: memref<32x128xf32, #tpu.memory_space<vmem>>) attributes {dimension_semantics = [#tpu.dimension_semantics<parallel>], iteration_bounds = array<i64: 1>, scalar_prefetch = 0 : i64, scratch_operands = 0 : i64, tpu.core_type = #tpu.core_type<tc>, window_params = [{pipeline_mode = #tpu.pipeline_mode<synchronous>, transform_indices = @transform_0, window_bounds = array<i64: 32, 800>}, {pipeline_mode = #tpu.pipeline_mode<synchronous>, transform_indices = @transform_1, window_bounds = array<i64: 32, 1>}, {pipeline_mode = #tpu.pipeline_mode<synchronous>, transform_indices = @transform_2, window_bounds = array<i64: 32, 1>}, {transform_indices = @transform_3, window_bounds = array<i64: 800, 128>}, {transform_indices = @transform_4, window_bounds = array<i64: 32, 128>}]} {
    %c0 = arith.constant 0 : index
    %c0_0 = arith.constant 0 : index
    %0 = vector.load %arg1[%c0, %c0_0] : memref<32x800xbf16, #tpu.memory_space<vmem>>, vector<32x800xbf16>
    %c0_1 = arith.constant 0 : index
    %c0_2 = arith.constant 0 : index
    %1 = vector.load %arg4[%c0_1, %c0_2] : memref<800x128xbf16, #tpu.memory_space<vmem>>, vector<800x128xbf16>
    %cst = arith.constant dense<0.000000e+00> : vector<32x128xf32>
    %2 = tpu.matmul %0, %1, %cst {dimension_numbers = #tpu.dot_dimension_numbers<[1], [0], [0], [1], [0, 0, 1, 1], [], []>} : vector<32x800xbf16>, vector<800x128xbf16>, vector<32x128xf32> -> vector<32x128xf32>
    %c0_3 = arith.constant 0 : index
    %c0_4 = arith.constant 0 : index
    %3 = vector.load %arg2[%c0_3, %c0_4] : memref<32x1xf32, #tpu.memory_space<vmem>>, vector<32x1xf32>
    %4 = vector.broadcast %3 : vector<32x1xf32> to vector<32x128xf32>
    %5 = arith.mulf %2, %4 : vector<32x128xf32>
    %c0_5 = arith.constant 0 : index
    %c0_6 = arith.constant 0 : index
    %6 = vector.load %arg3[%c0_5, %c0_6] : memref<32x1xf32, #tpu.memory_space<vmem>>, vector<32x1xf32>
    %7 = vector.broadcast %6 : vector<32x1xf32> to vector<32x128xf32>
    %8 = arith.addf %5, %7 : vector<32x128xf32>
    %c0_7 = arith.constant 0 : index
    %c0_8 = arith.constant 0 : index
    %9 = vector.load %arg5[%c0_7, %c0_8] : memref<32x128xf32, #tpu.memory_space<vmem>>, vector<32x128xf32>
    tpu.vector_store %arg5[%c0_7, %c0_8], %8 {strides = array<i32>} : memref<32x128xf32, #tpu.memory_space<vmem>>, vector<32x128xf32>,
    return
  }
  func.func @transform_0(%arg0: i32) -> (i32, i32) {
    %c0_i32 = arith.constant 0 : i32
    %c0_i32_0 = arith.constant 0 : i32
    %c0_i32_1 = arith.constant 0 : i32
    return %c0_i32, %c0_i32_0 : i32, i32
  }
  func.func @transform_1(%arg0: i32) -> (i32, i32) {
    %c0_i32 = arith.constant 0 : i32
    %c0_i32_0 = arith.constant 0 : i32
    %c0_i32_1 = arith.constant 0 : i32
    return %c0_i32, %c0_i32_0 : i32, i32
  }
  func.func @transform_2(%arg0: i32) -> (i32, i32) {
    %c0_i32 = arith.constant 0 : i32
    %c0_i32_0 = arith.constant 0 : i32
    %c0_i32_1 = arith.constant 0 : i32
    return %c0_i32, %c0_i32_0 : i32, i32
  }
  func.func @transform_3(%arg0: i32) -> (i32, i32) {
    %c0_i32 = arith.constant 0 : i32
    %c0_i32_0 = arith.constant 0 : i32
    return %c0_i32, %arg0 : i32, i32
  }
  func.func @transform_4(%arg0: i32) -> (i32, i32) {
    %c0_i32 = arith.constant 0 : i32
    %c0_i32_0 = arith.constant 0 : i32
    return %c0_i32, %arg0 : i32, i32
  }
}

module attributes {stable_mosaic.version = 11 : i64} {
  func.func @_conv_kernel(%arg0: i32, %arg1: memref<32x288xbf16, #tpu.memory_space<vmem>>, %arg2: memref<32x1xf32, #tpu.memory_space<vmem>>, %arg3: memref<32x1xf32, #tpu.memory_space<vmem>>, %arg4: memref<288x128xbf16, #tpu.memory_space<vmem>>, %arg5: memref<32x128xf32, #tpu.memory_space<vmem>>) attributes {dimension_semantics = [#tpu.dimension_semantics<parallel>], iteration_bounds = array<i64: 1>, scalar_prefetch = 0 : i64, scratch_operands = 0 : i64, tpu.core_type = #tpu.core_type<tc>, window_params = [{pipeline_mode = #tpu.pipeline_mode<synchronous>, transform_indices = @transform_0, window_bounds = array<i64: 32, 288>}, {pipeline_mode = #tpu.pipeline_mode<synchronous>, transform_indices = @transform_1, window_bounds = array<i64: 32, 1>}, {pipeline_mode = #tpu.pipeline_mode<synchronous>, transform_indices = @transform_2, window_bounds = array<i64: 32, 1>}, {transform_indices = @transform_3, window_bounds = array<i64: 288, 128>}, {transform_indices = @transform_4, window_bounds = array<i64: 32, 128>}]} {
    %c0 = arith.constant 0 : index
    %c0_0 = arith.constant 0 : index
    %0 = vector.load %arg1[%c0, %c0_0] : memref<32x288xbf16, #tpu.memory_space<vmem>>, vector<32x288xbf16>
    %c0_1 = arith.constant 0 : index
    %c0_2 = arith.constant 0 : index
    %1 = vector.load %arg4[%c0_1, %c0_2] : memref<288x128xbf16, #tpu.memory_space<vmem>>, vector<288x128xbf16>
    %cst = arith.constant dense<0.000000e+00> : vector<32x128xf32>
    %2 = tpu.matmul %0, %1, %cst {dimension_numbers = #tpu.dot_dimension_numbers<[1], [0], [0], [1], [0, 0, 1, 1], [], []>} : vector<32x288xbf16>, vector<288x128xbf16>, vector<32x128xf32> -> vector<32x128xf32>
    %c0_3 = arith.constant 0 : index
    %c0_4 = arith.constant 0 : index
    %3 = vector.load %arg2[%c0_3, %c0_4] : memref<32x1xf32, #tpu.memory_space<vmem>>, vector<32x1xf32>
    %4 = vector.broadcast %3 : vector<32x1xf32> to vector<32x128xf32>
    %5 = arith.mulf %2, %4 : vector<32x128xf32>
    %c0_5 = arith.constant 0 : index
    %c0_6 = arith.constant 0 : index
    %6 = vector.load %arg3[%c0_5, %c0_6] : memref<32x1xf32, #tpu.memory_space<vmem>>, vector<32x1xf32>
    %7 = vector.broadcast %6 : vector<32x1xf32> to vector<32x128xf32>
    %8 = arith.addf %5, %7 : vector<32x128xf32>
    %c0_7 = arith.constant 0 : index
    %c0_8 = arith.constant 0 : index
    %9 = vector.load %arg5[%c0_7, %c0_8] : memref<32x128xf32, #tpu.memory_space<vmem>>, vector<32x128xf32>
    tpu.vector_store %arg5[%c0_7, %c0_8], %8 {strides = array<i32>} : memref<32x128xf32, #tpu.memory_space<vmem>>, vector<32x128xf32>,
    return
  }
  func.func @transform_0(%arg0: i32) -> (i32, i32) {
    %c0_i32 = arith.constant 0 : i32
    %c0_i32_0 = arith.constant 0 : i32
    %c0_i32_1 = arith.constant 0 : i32
    return %c0_i32, %c0_i32_0 : i32, i32
  }
  func.func @transform_1(%arg0: i32) -> (i32, i32) {
    %c0_i32 = arith.constant 0 : i32
    %c0_i32_0 = arith.constant 0 : i32
    %c0_i32_1 = arith.constant 0 : i32
    return %c0_i32, %c0_i32_0 : i32, i32
  }
  func.func @transform_2(%arg0: i32) -> (i32, i32) {
    %c0_i32 = arith.constant 0 : i32
    %c0_i32_0 = arith.constant 0 : i32
    %c0_i32_1 = arith.constant 0 : i32
    return %c0_i32, %c0_i32_0 : i32, i32
  }
  func.func @transform_3(%arg0: i32) -> (i32, i32) {
    %c0_i32 = arith.constant 0 : i32
    %c0_i32_0 = arith.constant 0 : i32
    return %c0_i32, %arg0 : i32, i32
  }
  func.func @transform_4(%arg0: i32) -> (i32, i32) {
    %c0_i32 = arith.constant 0 : i32
    %c0_i32_0 = arith.constant 0 : i32
    return %c0_i32, %arg0 : i32, i32
  }
}

module attributes {stable_mosaic.version = 11 : i64} {
  func.func @_conv_kernel(%arg0: i32, %arg1: memref<32x288xbf16, #tpu.memory_space<vmem>>, %arg2: memref<32x1xf32, #tpu.memory_space<vmem>>, %arg3: memref<32x1xf32, #tpu.memory_space<vmem>>, %arg4: memref<288x128xbf16, #tpu.memory_space<vmem>>, %arg5: memref<32x128xf32, #tpu.memory_space<vmem>>) attributes {dimension_semantics = [#tpu.dimension_semantics<parallel>], iteration_bounds = array<i64: 1>, scalar_prefetch = 0 : i64, scratch_operands = 0 : i64, tpu.core_type = #tpu.core_type<tc>, window_params = [{pipeline_mode = #tpu.pipeline_mode<synchronous>, transform_indices = @transform_0, window_bounds = array<i64: 32, 288>}, {pipeline_mode = #tpu.pipeline_mode<synchronous>, transform_indices = @transform_1, window_bounds = array<i64: 32, 1>}, {pipeline_mode = #tpu.pipeline_mode<synchronous>, transform_indices = @transform_2, window_bounds = array<i64: 32, 1>}, {transform_indices = @transform_3, window_bounds = array<i64: 288, 128>}, {transform_indices = @transform_4, window_bounds = array<i64: 32, 128>}]} {
    %c0 = arith.constant 0 : index
    %c0_0 = arith.constant 0 : index
    %0 = vector.load %arg1[%c0, %c0_0] : memref<32x288xbf16, #tpu.memory_space<vmem>>, vector<32x288xbf16>
    %c0_1 = arith.constant 0 : index
    %c0_2 = arith.constant 0 : index
    %1 = vector.load %arg4[%c0_1, %c0_2] : memref<288x128xbf16, #tpu.memory_space<vmem>>, vector<288x128xbf16>
    %cst = arith.constant dense<0.000000e+00> : vector<32x128xf32>
    %2 = tpu.matmul %0, %1, %cst {dimension_numbers = #tpu.dot_dimension_numbers<[1], [0], [0], [1], [0, 0, 1, 1], [], []>} : vector<32x288xbf16>, vector<288x128xbf16>, vector<32x128xf32> -> vector<32x128xf32>
    %c0_3 = arith.constant 0 : index
    %c0_4 = arith.constant 0 : index
    %3 = vector.load %arg2[%c0_3, %c0_4] : memref<32x1xf32, #tpu.memory_space<vmem>>, vector<32x1xf32>
    %4 = vector.broadcast %3 : vector<32x1xf32> to vector<32x128xf32>
    %5 = arith.mulf %2, %4 : vector<32x128xf32>
    %c0_5 = arith.constant 0 : index
    %c0_6 = arith.constant 0 : index
    %6 = vector.load %arg3[%c0_5, %c0_6] : memref<32x1xf32, #tpu.memory_space<vmem>>, vector<32x1xf32>
    %7 = vector.broadcast %6 : vector<32x1xf32> to vector<32x128xf32>
    %8 = arith.addf %5, %7 : vector<32x128xf32>
    %cst_7 = arith.constant 0.000000e+00 : f32
    %9 = vector.broadcast %cst_7 : f32 to vector<32x128xf32>
    %10 = arith.cmpf ogt, %8, %9 : vector<32x128xf32>
    %cst_8 = arith.constant 2.000000e-01 : f32
    %11 = vector.broadcast %cst_8 : f32 to vector<32x128xf32>
    %12 = arith.mulf %11, %8 : vector<32x128xf32>
    %13 = arith.select %10, %8, %12 : vector<32x128xi1>, vector<32x128xf32>
    %c0_9 = arith.constant 0 : index
    %c0_10 = arith.constant 0 : index
    %14 = vector.load %arg5[%c0_9, %c0_10] : memref<32x128xf32, #tpu.memory_space<vmem>>, vector<32x128xf32>
    tpu.vector_store %arg5[%c0_9, %c0_10], %13 {strides = array<i32>} : memref<32x128xf32, #tpu.memory_space<vmem>>, vector<32x128xf32>,
    return
  }
  func.func @transform_0(%arg0: i32) -> (i32, i32) {
    %c0_i32 = arith.constant 0 : i32
    %c0_i32_0 = arith.constant 0 : i32
    %c0_i32_1 = arith.constant 0 : i32
    return %c0_i32, %c0_i32_0 : i32, i32
  }
  func.func @transform_1(%arg0: i32) -> (i32, i32) {
    %c0_i32 = arith.constant 0 : i32
    %c0_i32_0 = arith.constant 0 : i32
    %c0_i32_1 = arith.constant 0 : i32
    return %c0_i32, %c0_i32_0 : i32, i32
  }
  func.func @transform_2(%arg0: i32) -> (i32, i32) {
    %c0_i32 = arith.constant 0 : i32
    %c0_i32_0 = arith.constant 0 : i32
    %c0_i32_1 = arith.constant 0 : i32
    return %c0_i32, %c0_i32_0 : i32, i32
  }
  func.func @transform_3(%arg0: i32) -> (i32, i32) {
    %c0_i32 = arith.constant 0 : i32
    %c0_i32_0 = arith.constant 0 : i32
    return %c0_i32, %arg0 : i32, i32
  }
  func.func @transform_4(%arg0: i32) -> (i32, i32) {
    %c0_i32 = arith.constant 0 : i32
    %c0_i32_0 = arith.constant 0 : i32
    return %c0_i32, %arg0 : i32, i32
  }
}

module attributes {stable_mosaic.version = 11 : i64} {
  func.func @_conv_res_kernel(%arg0: i32, %arg1: memref<32x288xbf16, #tpu.memory_space<vmem>>, %arg2: memref<32x1xf32, #tpu.memory_space<vmem>>, %arg3: memref<32x1xf32, #tpu.memory_space<vmem>>, %arg4: memref<288x128xbf16, #tpu.memory_space<vmem>>, %arg5: memref<32x128xf32, #tpu.memory_space<vmem>>, %arg6: memref<32x128xf32, #tpu.memory_space<vmem>>) attributes {dimension_semantics = [#tpu.dimension_semantics<parallel>], iteration_bounds = array<i64: 1>, scalar_prefetch = 0 : i64, scratch_operands = 0 : i64, tpu.core_type = #tpu.core_type<tc>, window_params = [{pipeline_mode = #tpu.pipeline_mode<synchronous>, transform_indices = @transform_0, window_bounds = array<i64: 32, 288>}, {pipeline_mode = #tpu.pipeline_mode<synchronous>, transform_indices = @transform_1, window_bounds = array<i64: 32, 1>}, {pipeline_mode = #tpu.pipeline_mode<synchronous>, transform_indices = @transform_2, window_bounds = array<i64: 32, 1>}, {transform_indices = @transform_3, window_bounds = array<i64: 288, 128>}, {transform_indices = @transform_4, window_bounds = array<i64: 32, 128>}, {transform_indices = @transform_5, window_bounds = array<i64: 32, 128>}]} {
    %c0 = arith.constant 0 : index
    %c0_0 = arith.constant 0 : index
    %0 = vector.load %arg1[%c0, %c0_0] : memref<32x288xbf16, #tpu.memory_space<vmem>>, vector<32x288xbf16>
    %c0_1 = arith.constant 0 : index
    %c0_2 = arith.constant 0 : index
    %1 = vector.load %arg4[%c0_1, %c0_2] : memref<288x128xbf16, #tpu.memory_space<vmem>>, vector<288x128xbf16>
    %cst = arith.constant dense<0.000000e+00> : vector<32x128xf32>
    %2 = tpu.matmul %0, %1, %cst {dimension_numbers = #tpu.dot_dimension_numbers<[1], [0], [0], [1], [0, 0, 1, 1], [], []>} : vector<32x288xbf16>, vector<288x128xbf16>, vector<32x128xf32> -> vector<32x128xf32>
    %c0_3 = arith.constant 0 : index
    %c0_4 = arith.constant 0 : index
    %3 = vector.load %arg2[%c0_3, %c0_4] : memref<32x1xf32, #tpu.memory_space<vmem>>, vector<32x1xf32>
    %4 = vector.broadcast %3 : vector<32x1xf32> to vector<32x128xf32>
    %5 = arith.mulf %2, %4 : vector<32x128xf32>
    %c0_5 = arith.constant 0 : index
    %c0_6 = arith.constant 0 : index
    %6 = vector.load %arg3[%c0_5, %c0_6] : memref<32x1xf32, #tpu.memory_space<vmem>>, vector<32x1xf32>
    %7 = vector.broadcast %6 : vector<32x1xf32> to vector<32x128xf32>
    %8 = arith.addf %5, %7 : vector<32x128xf32>
    %c0_7 = arith.constant 0 : index
    %c0_8 = arith.constant 0 : index
    %9 = vector.load %arg5[%c0_7, %c0_8] : memref<32x128xf32, #tpu.memory_space<vmem>>, vector<32x128xf32>
    %10 = arith.addf %8, %9 : vector<32x128xf32>
    %cst_9 = arith.constant 0.000000e+00 : f32
    %11 = vector.broadcast %cst_9 : f32 to vector<32x128xf32>
    %12 = arith.cmpf ogt, %10, %11 : vector<32x128xf32>
    %cst_10 = arith.constant 2.000000e-01 : f32
    %13 = vector.broadcast %cst_10 : f32 to vector<32x128xf32>
    %14 = arith.mulf %13, %10 : vector<32x128xf32>
    %15 = arith.select %12, %10, %14 : vector<32x128xi1>, vector<32x128xf32>
    %c0_11 = arith.constant 0 : index
    %c0_12 = arith.constant 0 : index
    %16 = vector.load %arg6[%c0_11, %c0_12] : memref<32x128xf32, #tpu.memory_space<vmem>>, vector<32x128xf32>
    tpu.vector_store %arg6[%c0_11, %c0_12], %15 {strides = array<i32>} : memref<32x128xf32, #tpu.memory_space<vmem>>, vector<32x128xf32>,
    return
  }
  func.func @transform_0(%arg0: i32) -> (i32, i32) {
    %c0_i32 = arith.constant 0 : i32
    %c0_i32_0 = arith.constant 0 : i32
    %c0_i32_1 = arith.constant 0 : i32
    return %c0_i32, %c0_i32_0 : i32, i32
  }
  func.func @transform_1(%arg0: i32) -> (i32, i32) {
    %c0_i32 = arith.constant 0 : i32
    %c0_i32_0 = arith.constant 0 : i32
    %c0_i32_1 = arith.constant 0 : i32
    return %c0_i32, %c0_i32_0 : i32, i32
  }
  func.func @transform_2(%arg0: i32) -> (i32, i32) {
    %c0_i32 = arith.constant 0 : i32
    %c0_i32_0 = arith.constant 0 : i32
    %c0_i32_1 = arith.constant 0 : i32
    return %c0_i32, %c0_i32_0 : i32, i32
  }
  func.func @transform_3(%arg0: i32) -> (i32, i32) {
    %c0_i32 = arith.constant 0 : i32
    %c0_i32_0 = arith.constant 0 : i32
    return %c0_i32, %arg0 : i32, i32
  }
  func.func @transform_4(%arg0: i32) -> (i32, i32) {
    %c0_i32 = arith.constant 0 : i32
    %c0_i32_0 = arith.constant 0 : i32
    return %c0_i32, %arg0 : i32, i32
  }
  func.func @transform_5(%arg0: i32) -> (i32, i32) {
    %c0_i32 = arith.constant 0 : i32
    %c0_i32_0 = arith.constant 0 : i32
    return %c0_i32, %arg0 : i32, i32
  }
}

</mosaic_0001>

<llo_original>
// kernel: feature_extractor_pallas.15
$region0: #{feature_extractor_pallas.15}
  #allocation0 [shape = 'u32[]', space=smem, size = 0x4, offset = 0x4, fixed_abs, tag = 'smem constant byte address 0x4 - core index']
  #allocation1 [shape = 'u32[72,128]{1,0:T(1,128)}', space=vmem, size = 0x9000, scoped, tag = 'internal scratch']
  %s0 = inlined_call_operand.vmem [shape: bf16[32,128], index: 0, kind: input, shape index: {}]
  %s1 = inlined_call_operand.vmem [shape: f32[32,1], index: 1, kind: input, shape index: {}]
  %s2 = inlined_call_operand.vmem [shape: f32[32,1], index: 2, kind: input, shape index: {}]
  %s3 = inlined_call_operand.vmem [shape: bf16[128,128], index: 3, kind: input, shape index: {}]
  %s4 = inlined_call_operand.vmem [shape: f32[32,128], index: 4, kind: output, shape index: {}]
  %s5 = sld [smem:[#allocation0]]
  $region26: #{feature_extractor_pallas.15} parent=0
    _
  %s7 = ssub.s32 1, %s5
  %s8 = scalar_select 0, %s7, %s5
  // Predicated region
  $region2: #{feature_extractor_pallas.15} parent=0 // pred_check
    _
  $region3: #{feature_extractor_pallas.15} parent=0 // pred_check_branch
    %10 = sbr.rel (0) target = $region5
  $region4: #{feature_extractor_pallas.15} parent=0 // pred_region
    _
  $region5: #{feature_extractor_pallas.15} parent=0 // pred_fallthru
    _
  // Predicated region
  $region6: #{feature_extractor_pallas.15} parent=0 // pred_check
    _
  $region7: #{feature_extractor_pallas.15} parent=0 // pred_check_branch
    %12 = sbr.rel (0) target = $region9
  $region8: #{feature_extractor_pallas.15} parent=0 // pred_region
    _
  $region9: #{feature_extractor_pallas.15} parent=0 // pred_fallthru
    _
  // Predicated region
  $region10: #{feature_extractor_pallas.15} parent=0 // pred_check
    _
  $region11: #{feature_extractor_pallas.15} parent=0 // pred_check_branch
    %14 = sbr.rel (0) target = $region13
  $region12: #{feature_extractor_pallas.15} parent=0 // pred_region
    _
  $region13: #{feature_extractor_pallas.15} parent=0 // pred_fallthru
    _
  // Predicated region
  $region14: #{feature_extractor_pallas.15} parent=0 // pred_check
    _
  $region15: #{feature_extractor_pallas.15} parent=0 // pred_check_branch
    %16 = sbr.rel (0) target = $region17
  $region16: #{feature_extractor_pallas.15} parent=0 // pred_region
    _
  $region17: #{feature_extractor_pallas.15} parent=0 // pred_fallthru
    _
  %v17 = vld [vmem:[%s0] sm:$0xf]
  %v18 = vld [vmem:[%s0 + $0x4] sm:$0xf]
  %v19 = vld [vmem:[%s0 + $0x8] sm:$0xf]
  %v20 = vld [vmem:[%s0 + $0xc] sm:$0xf]
  %v21 = vld [vmem:[%s3] sm:$0xf]
  %v22 = vld [vmem:[%s3 + $0x4] sm:$0xf]
  %v23 = vld [vmem:[%s3 + $0x8] sm:$0xf]
  %v24 = vld [vmem:[%s3 + $0xc] sm:$0xf]
  %v25 = vld [vmem:[%s3 + $0x10] sm:$0xf]
  %v26 = vld [vmem:[%s3 + $0x14] sm:$0xf]
  %v27 = vld [vmem:[%s3 + $0x18] sm:$0xf]
  %v28 = vld [vmem:[%s3 + $0x1c] sm:$0xf]
  %v29 = vld [vmem:[%s3 + $0x20] sm:$0xf]
  %v30 = vld [vmem:[%s3 + $0x24] sm:$0xf]
  %v31 = vld [vmem:[%s3 + $0x28] sm:$0xf]
  %v32 = vld [vmem:[%s3 + $0x2c] sm:$0xf]
  %v33 = vld [vmem:[%s3 + $0x30] sm:$0xf]
  %v34 = vld [vmem:[%s3 + $0x34] sm:$0xf]
  %v35 = vld [vmem:[%s3 + $0x38] sm:$0xf]
  %v36 = vld [vmem:[%s3 + $0x3c] sm:$0xf]
  %v41 = vunpack.c.l.b16 %v17
  %v42 = vunpack.c.l.b16 %v18
  %v43 = vunpack.c.l.b16 %v19
  %v44 = vunpack.c.l.b16 %v20
  %v45 = vpack.c.b16 %v42, %v41
  %v46 = vpack.c.b16 %v44, %v43
  %v65 = vunpack.c.l.b16 %v21
  %v66 = vunpack.c.l.b16 %v22
  %v67 = vunpack.c.l.b16 %v23
  %v68 = vunpack.c.l.b16 %v24
  %v69 = vunpack.c.l.b16 %v25
  %v70 = vunpack.c.l.b16 %v26
  %v71 = vunpack.c.l.b16 %v27
  %v72 = vunpack.c.l.b16 %v28
  %v73 = vunpack.c.l.b16 %v29
  %v74 = vunpack.c.l.b16 %v30
  %v75 = vunpack.c.l.b16 %v31
  %v76 = vunpack.c.l.b16 %v32
  %v77 = vunpack.c.l.b16 %v33
  %v78 = vunpack.c.l.b16 %v34
  %v79 = vunpack.c.l.b16 %v35
  %v80 = vunpack.c.l.b16 %v36
  %v81 = vpack.c.b16 %v66, %v65
  %v82 = vpack.c.b16 %v68, %v67
  %v83 = vpack.c.b16 %v70, %v69
  %v84 = vpack.c.b16 %v72, %v71
  %v85 = vpack.c.b16 %v74, %v73
  %v86 = vpack.c.b16 %v76, %v75
  %v87 = vpack.c.b16 %v78, %v77
  %v88 = vpack.c.b16 %v80, %v79
  %97 = vmatpush.bf16.msra.mxu0 %v88
  %98 = vmatpush.bf16.msra.mxu0 %v87
  %99 = vmatpush.bf16.msra.mxu0 %v86
  %100 = vmatpush.bf16.msra.mxu0 %v85
  %101 = vmatpush.bf16.msra.mxu0 %v84
  %102 = vmatpush.bf16.msra.mxu0 %v83
  %103 = vmatpush.bf16.msra.mxu0 %v82
  %104 = vmatpush.bf16.msra.mxu0 %v81
  %105 = vmatmul.bf16.gmra.mxu0 %v45
  %v106 = vpop.f32.mrf.mxu0
  %v107 = vadd.f32 0.0, %v106
  %v108 = vpop.f32.mrf.mxu0
  %v109 = vadd.f32 0.0, %v108
  %110 = vmatmul.bf16.gmra.mxu0 %v46
  %v111 = vpop.f32.mrf.mxu0
  %v112 = vadd.f32 0.0, %v111
  %v113 = vpop.f32.mrf.mxu0
  %v114 = vadd.f32 0.0, %v113
  %115 = vdwg.mxu0
  %v116 = vld [vmem:[%s1] sm:$0xff]
  %v117 = vld [vmem:[%s1 + $0x8] sm:$0xff]
  %v118 = vld [vmem:[%s1 + $0x10] sm:$0xff]
  %v119 = vld [vmem:[%s1 + $0x18] sm:$0xff]
  %121 = vset.pattern.permute.xlu0 0
  %122 = vperm.xlu0 %121, %v116
  %v123 = vpop.permute.xlu0 %122
  %126 = vset.pattern.permute.xlu0 0
  %127 = vperm.xlu0 %126, %v117
  %v128 = vpop.permute.xlu0 %127
  %131 = vset.pattern.permute.xlu0 0
  %132 = vperm.xlu0 %131, %v118
  %v133 = vpop.permute.xlu0 %132
  %136 = vset.pattern.permute.xlu0 0
  %137 = vperm.xlu0 %136, %v119
  %v138 = vpop.permute.xlu0 %137
  %v140 = vmul.f32 %v107, %v123
  %v141 = vmul.f32 %v109, %v128
  %v142 = vmul.f32 %v112, %v133
  %v143 = vmul.f32 %v114, %v138
  %v144 = vld [vmem:[%s2] sm:$0xff]
  %v145 = vld [vmem:[%s2 + $0x8] sm:$0xff]
  %v146 = vld [vmem:[%s2 + $0x10] sm:$0xff]
  %v147 = vld [vmem:[%s2 + $0x18] sm:$0xff]
  %149 = vset.pattern.permute.xlu0 0
  %150 = vperm.xlu0 %149, %v144
  %v151 = vpop.permute.xlu0 %150
  %154 = vset.pattern.permute.xlu0 0
  %155 = vperm.xlu0 %154, %v145
  %v156 = vpop.permute.xlu0 %155
  %159 = vset.pattern.permute.xlu0 0
  %160 = vperm.xlu0 %159, %v146
  %v161 = vpop.permute.xlu0 %160
  %164 = vset.pattern.permute.xlu0 0
  %165 = vperm.xlu0 %164, %v147
  %v166 = vpop.permute.xlu0 %165
  %v168 = vadd.f32 %v140, %v151
  %v169 = vadd.f32 %v141, %v156
  %v170 = vadd.f32 %v142, %v161
  %v171 = vadd.f32 %v143, %v166
  %172 = vst [vmem:[%s4] sm:$0xff] %v168
  %173 = vst [vmem:[%s4 + $0x8] sm:$0xff] %v169
  %174 = vst [vmem:[%s4 + $0x10] sm:$0xff] %v170
  %175 = vst [vmem:[%s4 + $0x18] sm:$0xff] %v171
  // Predicated region
  $region18: #{feature_extractor_pallas.15} parent=0 // pred_check
    _
  $region19: #{feature_extractor_pallas.15} parent=0 // pred_check_branch
    %177 = sbr.rel (0) target = $region21
  $region20: #{feature_extractor_pallas.15} parent=0 // pred_region
    _
  $region21: #{feature_extractor_pallas.15} parent=0 // pred_fallthru
    _
  // Predicated region
  $region22: #{feature_extractor_pallas.15} parent=0 // pred_check
    _
  $region23: #{feature_extractor_pallas.15} parent=0 // pred_check_branch
    %179 = sbr.rel (0) target = $region25
  $region24: #{feature_extractor_pallas.15} parent=0 // pred_region
    _
  $region25: #{feature_extractor_pallas.15} parent=0 // pred_fallthru
    _

// kernel: feature_extractor_pallas.16
$region0: #{feature_extractor_pallas.16}
  #allocation0 [shape = 'u32[]', space=smem, size = 0x4, offset = 0x4, fixed_abs, tag = 'smem constant byte address 0x4 - core index']
  #allocation1 [shape = 'u32[72,128]{1,0:T(1,128)}', space=vmem, size = 0x9000, scoped, tag = 'internal scratch']
  %s0 = inlined_call_operand.vmem [shape: bf16[32,800], index: 0, kind: input, shape index: {}]
  %s1 = inlined_call_operand.vmem [shape: f32[32,1], index: 1, kind: input, shape index: {}]
  %s2 = inlined_call_operand.vmem [shape: f32[32,1], index: 2, kind: input, shape index: {}]
  %s3 = inlined_call_operand.vmem [shape: bf16[800,128], index: 3, kind: input, shape index: {}]
  %s4 = inlined_call_operand.vmem [shape: f32[32,128], index: 4, kind: output, shape index: {}]
  %s5 = sld [smem:[#allocation0]]
  $region26: #{feature_extractor_pallas.16} parent=0
    _
  %s7 = ssub.s32 1, %s5
  %s8 = scalar_select 0, %s7, %s5
  // Predicated region
  $region2: #{feature_extractor_pallas.16} parent=0 // pred_check
    _
  $region3: #{feature_extractor_pallas.16} parent=0 // pred_check_branch
    %10 = sbr.rel (0) target = $region5
  $region4: #{feature_extractor_pallas.16} parent=0 // pred_region
    _
  $region5: #{feature_extractor_pallas.16} parent=0 // pred_fallthru
    _
  // Predicated region
  $region6: #{feature_extractor_pallas.16} parent=0 // pred_check
    _
  $region7: #{feature_extractor_pallas.16} parent=0 // pred_check_branch
    %12 = sbr.rel (0) target = $region9
  $region8: #{feature_extractor_pallas.16} parent=0 // pred_region
    _
  $region9: #{feature_extractor_pallas.16} parent=0 // pred_fallthru
    _
  // Predicated region
  $region10: #{feature_extractor_pallas.16} parent=0 // pred_check
    _
  $region11: #{feature_extractor_pallas.16} parent=0 // pred_check_branch
    %14 = sbr.rel (0) target = $region13
  $region12: #{feature_extractor_pallas.16} parent=0 // pred_region
    _
  $region13: #{feature_extractor_pallas.16} parent=0 // pred_fallthru
    _
  // Predicated region
  $region14: #{feature_extractor_pallas.16} parent=0 // pred_check
    _
  $region15: #{feature_extractor_pallas.16} parent=0 // pred_check_branch
    %16 = sbr.rel (0) target = $region17
  $region16: #{feature_extractor_pallas.16} parent=0 // pred_region
    _
  $region17: #{feature_extractor_pallas.16} parent=0 // pred_fallthru
    _
  %v18 = vld [vmem:[%s0] sm:$0xff]
  %v19 = vld [vmem:[%s0 + $0x8] sm:$0xff]
  %v20 = vld [vmem:[%s0 + $0x10] sm:$0xff]
  %v21 = vld [vmem:[%s0 + $0x18] sm:$0xf]
  %v22 = vld [vmem:[%s0 + $0x1c] sm:$0xff]
  %v23 = vld [vmem:[%s0 + $0x24] sm:$0xff]
  %v24 = vld [vmem:[%s0 + $0x2c] sm:$0xff]
  %v25 = vld [vmem:[%s0 + $0x34] sm:$0xf]
  %v26 = vld [vmem:[%s0 + $0x38] sm:$0xff]
  %v27 = vld [vmem:[%s0 + $0x40] sm:$0xff]
  %v28 = vld [vmem:[%s0 + $0x48] sm:$0xff]
  %v29 = vld [vmem:[%s0 + $0x50] sm:$0xf]
  %v30 = vld [vmem:[%s0 + $0x54] sm:$0xff]
  %v31 = vld [vmem:[%s0 + $0x5c] sm:$0xff]
  %v32 = vld [vmem:[%s0 + $0x64] sm:$0xff]
  %v33 = vld [vmem:[%s0 + $0x6c] sm:$0xf]
  %v34 = vld [vmem:[%s3] sm:$0xf]
  %v35 = vld [vmem:[%s3 + $0x4] sm:$0xf]
  %v36 = vld [vmem:[%s3 + $0x8] sm:$0xf]
  %v37 = vld [vmem:[%s3 + $0xc] sm:$0xf]
  %v38 = vld [vmem:[%s3 + $0x10] sm:$0xf]
  %v39 = vld [vmem:[%s3 + $0x14] sm:$0xf]
  %v40 = vld [vmem:[%s3 + $0x18] sm:$0xf]
  %v41 = vld [vmem:[%s3 + $0x1c] sm:$0xf]
  %v42 = vld [vmem:[%s3 + $0x20] sm:$0xf]
  %v43 = vld [vmem:[%s3 + $0x24] sm:$0xf]
  %v44 = vld [vmem:[%s3 + $0x28] sm:$0xf]
  %v45 = vld [vmem:[%s3 + $0x2c] sm:$0xf]
  %v46 = vld [vmem:[%s3 + $0x30] sm:$0xf]
  %v47 = vld [vmem:[%s3 + $0x34] sm:$0xf]
  %v48 = vld [vmem:[%s3 + $0x38] sm:$0xf]
  %v49 = vld [vmem:[%s3 + $0x3c] sm:$0xf]
  %v50 = vld [vmem:[%s3 + $0x40] sm:$0xf]
  %v51 = vld [vmem:[%s3 + $0x44] sm:$0xf]
  %v52 = vld [vmem:[%s3 + $0x48] sm:$0xf]
  %v53 = vld [vmem:[%s3 + $0x4c] sm:$0xf]
  %v54 = vld [vmem:[%s3 + $0x50] sm:$0xf]
  %v55 = vld [vmem:[%s3 + $0x54] sm:$0xf]
  %v56 = vld [vmem:[%s3 + $0x58] sm:$0xf]
  %v57 = vld [vmem:[%s3 + $0x5c] sm:$0xf]
  %v58 = vld [vmem:[%s3 + $0x60] sm:$0xf]
  %v59 = vld [vmem:[%s3 + $0x64] sm:$0xf]
  %v60 = vld [vmem:[%s3 + $0x68] sm:$0xf]
  %v61 = vld [vmem:[%s3 + $0x6c] sm:$0xf]
  %v62 = vld [vmem:[%s3 + $0x70] sm:$0xf]
  %v63 = vld [vmem:[%s3 + $0x74] sm:$0xf]
  %v64 = vld [vmem:[%s3 + $0x78] sm:$0xf]
  %v65 = vld [vmem:[%s3 + $0x7c] sm:$0xf]
  %v66 = vld [vmem:[%s3 + $0x80] sm:$0xf]
  %v67 = vld [vmem:[%s3 + $0x84] sm:$0xf]
  %v68 = vld [vmem:[%s3 + $0x88] sm:$0xf]
  %v69 = vld [vmem:[%s3 + $0x8c] sm:$0xf]
  %v70 = vld [vmem:[%s3 + $0x90] sm:$0xf]
  %v71 = vld [vmem:[%s3 + $0x94] sm:$0xf]
  %v72 = vld [vmem:[%s3 + $0x98] sm:$0xf]
  %v73 = vld [vmem:[%s3 + $0x9c] sm:$0xf]
  %v74 = vld [vmem:[%s3 + $0xa0] sm:$0xf]
  %v75 = vld [vmem:[%s3 + $0xa4] sm:$0xf]
  %v76 = vld [vmem:[%s3 + $0xa8] sm:$0xf]
  %v77 = vld [vmem:[%s3 + $0xac] sm:$0xf]
  %v78 = vld [vmem:[%s3 + $0xb0] sm:$0xf]
  %v79 = vld [vmem:[%s3 + $0xb4] sm:$0xf]
  %v80 = vld [vmem:[%s3 + $0xb8] sm:$0xf]
  %v81 = vld [vmem:[%s3 + $0xbc] sm:$0xf]
  %v82 = vld [vmem:[%s3 + $0xc0] sm:$0xf]
  %v83 = vld [vmem:[%s3 + $0xc4] sm:$0xf]
  %v84 = vld [vmem:[%s3 + $0xc8] sm:$0xf]
  %v85 = vld [vmem:[%s3 + $0xcc] sm:$0xf]
  %v86 = vld [vmem:[%s3 + $0xd0] sm:$0xf]
  %v87 = vld [vmem:[%s3 + $0xd4] sm:$0xf]
  %v88 = vld [vmem:[%s3 + $0xd8] sm:$0xf]
  %v89 = vld [vmem:[%s3 + $0xdc] sm:$0xf]
  %v90 = vld [vmem:[%s3 + $0xe0] sm:$0xf]
  %v91 = vld [vmem:[%s3 + $0xe4] sm:$0xf]
  %v92 = vld [vmem:[%s3 + $0xe8] sm:$0xf]
  %v93 = vld [vmem:[%s3 + $0xec] sm:$0xf]
  %v94 = vld [vmem:[%s3 + $0xf0] sm:$0xf]
  %v95 = vld [vmem:[%s3 + $0xf4] sm:$0xf]
  %v96 = vld [vmem:[%s3 + $0xf8] sm:$0xf]
  %v97 = vld [vmem:[%s3 + $0xfc] sm:$0xf]
  %v98 = vld [vmem:[%s3 + $0x100] sm:$0xf]
  %v99 = vld [vmem:[%s3 + $0x104] sm:$0xf]
  %v100 = vld [vmem:[%s3 + $0x108] sm:$0xf]
  %v101 = vld [vmem:[%s3 + $0x10c] sm:$0xf]
  %v102 = vld [vmem:[%s3 + $0x110] sm:$0xf]
  %v103 = vld [vmem:[%s3 + $0x114] sm:$0xf]
  %v104 = vld [vmem:[%s3 + $0x118] sm:$0xf]
  %v105 = vld [vmem:[%s3 + $0x11c] sm:$0xf]
  %v106 = vld [vmem:[%s3 + $0x120] sm:$0xf]
  %v107 = vld [vmem:[%s3 + $0x124] sm:$0xf]
  %v108 = vld [vmem:[%s3 + $0x128] sm:$0xf]
  %v109 = vld [vmem:[%s3 + $0x12c] sm:$0xf]
  %v110 = vld [vmem:[%s3 + $0x130] sm:$0xf]
  %v111 = vld [vmem:[%s3 + $0x134] sm:$0xf]
  %v112 = vld [vmem:[%s3 + $0x138] sm:$0xf]
  %v113 = vld [vmem:[%s3 + $0x13c] sm:$0xf]
  %v114 = vld [vmem:[%s3 + $0x140] sm:$0xf]
  %v115 = vld [vmem:[%s3 + $0x144] sm:$0xf]
  %v116 = vld [vmem:[%s3 + $0x148] sm:$0xf]
  %v117 = vld [vmem:[%s3 + $0x14c] sm:$0xf]
  %v118 = vld [vmem:[%s3 + $0x150] sm:$0xf]
  %v119 = vld [vmem:[%s3 + $0x154] sm:$0xf]
  %v120 = vld [vmem:[%s3 + $0x158] sm:$0xf]
  %v121 = vld [vmem:[%s3 + $0x15c] sm:$0xf]
  %v122 = vld [vmem:[%s3 + $0x160] sm:$0xf]
  %v123 = vld [vmem:[%s3 + $0x164] sm:$0xf]
  %v124 = vld [vmem:[%s3 + $0x168] sm:$0xf]
  %v125 = vld [vmem:[%s3 + $0x16c] sm:$0xf]
  %v126 = vld [vmem:[%s3 + $0x170] sm:$0xf]
  %v127 = vld [vmem:[%s3 + $0x174] sm:$0xf]
  %v128 = vld [vmem:[%s3 + $0x178] sm:$0xf]
  %v129 = vld [vmem:[%s3 + $0x17c] sm:$0xf]
  %v130 = vld [vmem:[%s3 + $0x180] sm:$0xf]
  %v131 = vld [vmem:[%s3 + $0x184] sm:$0xf]
  %v132 = vld [vmem:[%s3 + $0x188] sm:$0xf]
  %v133 = vld [vmem:[%s3 + $0x18c] sm:$0xf]
  %v150 = vunpack.c.l.b16 %v18
  %v151 = vunpack.c.h.b16 %v18
  %v152 = vunpack.c.l.b16 %v19
  %v153 = vunpack.c.h.b16 %v19
  %v154 = vunpack.c.l.b16 %v20
  %v155 = vunpack.c.h.b16 %v20
  %v156 = vunpack.c.l.b16 %v21
  %v157 = vunpack.c.l.b16 %v22
  %v158 = vunpack.c.h.b16 %v22
  %v159 = vunpack.c.l.b16 %v23
  %v160 = vunpack.c.h.b16 %v23
  %v161 = vunpack.c.l.b16 %v24
  %v162 = vunpack.c.h.b16 %v24
  %v163 = vunpack.c.l.b16 %v25
  %v164 = vunpack.c.l.b16 %v26
  %v165 = vunpack.c.h.b16 %v26
  %v166 = vunpack.c.l.b16 %v27
  %v167 = vunpack.c.h.b16 %v27
  %v168 = vunpack.c.l.b16 %v28
  %v169 = vunpack.c.h.b16 %v28
  %v170 = vunpack.c.l.b16 %v29
  %v171 = vunpack.c.l.b16 %v30
  %v172 = vunpack.c.h.b16 %v30
  %v173 = vunpack.c.l.b16 %v31
  %v174 = vunpack.c.h.b16 %v31
  %v175 = vunpack.c.l.b16 %v32
  %v176 = vunpack.c.h.b16 %v32
  %v177 = vunpack.c.l.b16 %v33
  %v178 = vpack.c.b16 %v157, %v150
  %v179 = vpack.c.b16 %v158, %v151
  %v180 = vpack.c.b16 %v159, %v152
  %v181 = vpack.c.b16 %v160, %v153
  %v182 = vpack.c.b16 %v161, %v154
  %v183 = vpack.c.b16 %v162, %v155
  %v184 = vpack.c.b16 %v163, %v156
  %v185 = vpack.c.b16 %v171, %v164
  %v186 = vpack.c.b16 %v172, %v165
  %v187 = vpack.c.b16 %v173, %v166
  %v188 = vpack.c.b16 %v174, %v167
  %v189 = vpack.c.b16 %v175, %v168
  %v190 = vpack.c.b16 %v176, %v169
  %v191 = vpack.c.b16 %v177, %v170
  %v304 = vunpack.c.l.b16 %v34
  %v305 = vunpack.c.l.b16 %v35
  %v306 = vunpack.c.l.b16 %v36
  %v307 = vunpack.c.l.b16 %v37
  %v308 = vunpack.c.l.b16 %v38
  %v309 = vunpack.c.l.b16 %v39
  %v310 = vunpack.c.l.b16 %v40
  %v311 = vunpack.c.l.b16 %v41
  %v312 = vunpack.c.l.b16 %v42
  %v313 = vunpack.c.l.b16 %v43
  %v314 = vunpack.c.l.b16 %v44
  %v315 = vunpack.c.l.b16 %v45
  %v316 = vunpack.c.l.b16 %v46
  %v317 = vunpack.c.l.b16 %v47
  %v318 = vunpack.c.l.b16 %v48
  %v319 = vunpack.c.l.b16 %v49
  %v320 = vunpack.c.l.b16 %v50
  %v321 = vunpack.c.l.b16 %v51
  %v322 = vunpack.c.l.b16 %v52
  %v323 = vunpack.c.l.b16 %v53
  %v324 = vunpack.c.l.b16 %v54
  %v325 = vunpack.c.l.b16 %v55
  %v326 = vunpack.c.l.b16 %v56
  %v327 = vunpack.c.l.b16 %v57
  %v328 = vunpack.c.l.b16 %v58
  %v329 = vunpack.c.l.b16 %v59
  %v330 = vunpack.c.l.b16 %v60
  %v331 = vunpack.c.l.b16 %v61
  %v332 = vunpack.c.l.b16 %v62
  %v333 = vunpack.c.l.b16 %v63
  %v334 = vunpack.c.l.b16 %v64
  %v335 = vunpack.c.l.b16 %v65
  %v336 = vunpack.c.l.b16 %v66
  %v337 = vunpack.c.l.b16 %v67
  %v338 = vunpack.c.l.b16 %v68
  %v339 = vunpack.c.l.b16 %v69
  %v340 = vunpack.c.l.b16 %v70
  %v341 = vunpack.c.l.b16 %v71
  %v342 = vunpack.c.l.b16 %v72
  %v343 = vunpack.c.l.b16 %v73
  %v344 = vunpack.c.l.b16 %v74
  %v345 = vunpack.c.l.b16 %v75
  %v346 = vunpack.c.l.b16 %v76
  %v347 = vunpack.c.l.b16 %v77
  %v348 = vunpack.c.l.b16 %v78
  %v349 = vunpack.c.l.b16 %v79
  %v350 = vunpack.c.l.b16 %v80
  %v351 = vunpack.c.l.b16 %v81
  %v352 = vunpack.c.l.b16 %v82
  %v353 = vunpack.c.l.b16 %v83
  %v354 = vunpack.c.l.b16 %v84
  %v355 = vunpack.c.l.b16 %v85
  %v356 = vunpack.c.l.b16 %v86
  %v357 = vunpack.c.l.b16 %v87
  %v358 = vunpack.c.l.b16 %v88
  %v359 = vunpack.c.l.b16 %v89
  %v360 = vunpack.c.l.b16 %v90
  %v361 = vunpack.c.l.b16 %v91
  %v362 = vunpack.c.l.b16 %v92
  %v363 = vunpack.c.l.b16 %v93
  %v364 = vunpack.c.l.b16 %v94
  %v365 = vunpack.c.l.b16 %v95
  %v366 = vunpack.c.l.b16 %v96
  %v367 = vunpack.c.l.b16 %v97
  %v368 = vunpack.c.l.b16 %v98
  %v369 = vunpack.c.l.b16 %v99
  %v370 = vunpack.c.l.b16 %v100
  %v371 = vunpack.c.l.b16 %v101
  %v372 = vunpack.c.l.b16 %v102
  %v373 = vunpack.c.l.b16 %v103
  %v374 = vunpack.c.l.b16 %v104
  %v375 = vunpack.c.l.b16 %v105
  %v376 = vunpack.c.l.b16 %v106
  %v377 = vunpack.c.l.b16 %v107
  %v378 = vunpack.c.l.b16 %v108
  %v379 = vunpack.c.l.b16 %v109
  %v380 = vunpack.c.l.b16 %v110
  %v381 = vunpack.c.l.b16 %v111
  %v382 = vunpack.c.l.b16 %v112
  %v383 = vunpack.c.l.b16 %v113
  %v384 = vunpack.c.l.b16 %v114
  %v385 = vunpack.c.l.b16 %v115
  %v386 = vunpack.c.l.b16 %v116
  %v387 = vunpack.c.l.b16 %v117
  %v388 = vunpack.c.l.b16 %v118
  %v389 = vunpack.c.l.b16 %v119
  %v390 = vunpack.c.l.b16 %v120
  %v391 = vunpack.c.l.b16 %v121
  %v392 = vunpack.c.l.b16 %v122
  %v393 = vunpack.c.l.b16 %v123
  %v394 = vunpack.c.l.b16 %v124
  %v395 = vunpack.c.l.b16 %v125
  %v396 = vunpack.c.l.b16 %v126
  %v397 = vunpack.c.l.b16 %v127
  %v398 = vunpack.c.l.b16 %v128
  %v399 = vunpack.c.l.b16 %v129
  %v400 = vunpack.c.l.b16 %v130
  %v401 = vunpack.c.l.b16 %v131
  %v402 = vunpack.c.l.b16 %v132
  %v403 = vunpack.c.l.b16 %v133
  %v404 = vpack.c.b16 %v305, %v304
  %v405 = vpack.c.b16 %v307, %v306
  %v406 = vpack.c.b16 %v309, %v308
  %v407 = vpack.c.b16 %v311, %v310
  %v408 = vpack.c.b16 %v313, %v312
  %v409 = vpack.c.b16 %v315, %v314
  %v410 = vpack.c.b16 %v317, %v316
  %v411 = vpack.c.b16 %v319, %v318
  %v412 = vpack.c.b16 %v321, %v320
  %v413 = vpack.c.b16 %v323, %v322
  %v414 = vpack.c.b16 %v325, %v324
  %v415 = vpack.c.b16 %v327, %v326
  %v416 = vpack.c.b16 %v329, %v328
  %v417 = vpack.c.b16 %v331, %v330
  %v418 = vpack.c.b16 %v333, %v332
  %v419 = vpack.c.b16 %v335, %v334
  %v420 = vpack.c.b16 %v337, %v336
  %v421 = vpack.c.b16 %v339, %v338
  %v422 = vpack.c.b16 %v341, %v340
  %v423 = vpack.c.b16 %v343, %v342
  %v424 = vpack.c.b16 %v345, %v344
  %v425 = vpack.c.b16 %v347, %v346
  %v426 = vpack.c.b16 %v349, %v348
  %v427 = vpack.c.b16 %v351, %v350
  %v428 = vpack.c.b16 %v353, %v352
  %v429 = vpack.c.b16 %v355, %v354
  %v430 = vpack.c.b16 %v357, %v356
  %v431 = vpack.c.b16 %v359, %v358
  %v432 = vpack.c.b16 %v361, %v360
  %v433 = vpack.c.b16 %v363, %v362
  %v434 = vpack.c.b16 %v365, %v364
  %v435 = vpack.c.b16 %v367, %v366
  %v436 = vpack.c.b16 %v369, %v368
  %v437 = vpack.c.b16 %v371, %v370
  %v438 = vpack.c.b16 %v373, %v372
  %v439 = vpack.c.b16 %v375, %v374
  %v440 = vpack.c.b16 %v377, %v376
  %v441 = vpack.c.b16 %v379, %v378
  %v442 = vpack.c.b16 %v381, %v380
  %v443 = vpack.c.b16 %v383, %v382
  %v444 = vpack.c.b16 %v385, %v384
  %v445 = vpack.c.b16 %v387, %v386
  %v446 = vpack.c.b16 %v389, %v388
  %v447 = vpack.c.b16 %v391, %v390
  %v448 = vpack.c.b16 %v393, %v392
  %v449 = vpack.c.b16 %v395, %v394
  %v450 = vpack.c.b16 %v397, %v396
  %v451 = vpack.c.b16 %v399, %v398
  %v452 = vpack.c.b16 %v401, %v400
  %v453 = vpack.c.b16 %v403, %v402
  %vm504 = vcmask 261120
  %v506 = vsel %vm504, %v184, 0
  %v509 = vsel %vm504, %v191, 0
  %511 = vmatpush.bf16.msra.mxu0 %v411
  %512 = vmatpush.bf16.msra.mxu0 %v410
  %513 = vmatpush.bf16.msra.mxu0 %v409
  %514 = vmatpush.bf16.msra.mxu0 %v408
  %515 = vmatpush.bf16.msra.mxu0 %v407
  %516 = vmatpush.bf16.msra.mxu0 %v406
  %517 = vmatpush.bf16.msra.mxu0 %v405
  %518 = vmatpush.bf16.msra.mxu0 %v404
  %519 = vmatmul.bf16.gmra.mxu0 %v178
  %v520 = vpop.f32.mrf.mxu0
  %v521 = vadd.f32 0.0, %v520
  %v522 = vpop.f32.mrf.mxu0
  %v523 = vadd.f32 0.0, %v522
  %524 = vmatmul.bf16.gmra.mxu0 %v185
  %v525 = vpop.f32.mrf.mxu0
  %v526 = vadd.f32 0.0, %v525
  %v527 = vpop.f32.mrf.mxu0
  %v528 = vadd.f32 0.0, %v527
  %529 = vdwg.mxu0
  %530 = vmatpush.bf16.msra.mxu0 %v419
  %531 = vmatpush.bf16.msra.mxu0 %v418
  %532 = vmatpush.bf16.msra.mxu0 %v417
  %533 = vmatpush.bf16.msra.mxu0 %v416
  %534 = vmatpush.bf16.msra.mxu0 %v415
  %535 = vmatpush.bf16.msra.mxu0 %v414
  %536 = vmatpush.bf16.msra.mxu0 %v413
  %537 = vmatpush.bf16.msra.mxu0 %v412
  %538 = vmatmul.bf16.gmra.mxu0 %v179
  %v539 = vpop.f32.mrf.mxu0
  %v540 = vadd.f32 %v521, %v539
  %v541 = vpop.f32.mrf.mxu0
  %v542 = vadd.f32 %v523, %v541
  %543 = vmatmul.bf16.gmra.mxu0 %v186
  %v544 = vpop.f32.mrf.mxu0
  %v545 = vadd.f32 %v526, %v544
  %v546 = vpop.f32.mrf.mxu0
  %v547 = vadd.f32 %v528, %v546
  %548 = vdwg.mxu0
  %549 = vmatpush.bf16.msra.mxu0 %v427
  %550 = vmatpush.bf16.msra.mxu0 %v426
  %551 = vmatpush.bf16.msra.mxu0 %v425
  %552 = vmatpush.bf16.msra.mxu0 %v424
  %553 = vmatpush.bf16.msra.mxu0 %v423
  %554 = vmatpush.bf16.msra.mxu0 %v422
  %555 = vmatpush.bf16.msra.mxu0 %v421
  %556 = vmatpush.bf16.msra.mxu0 %v420
  %557 = vmatmul.bf16.gmra.mxu0 %v180
  %v558 = vpop.f32.mrf.mxu0
  %v559 = vadd.f32 %v540, %v558
  %v560 = vpop.f32.mrf.mxu0
  %v561 = vadd.f32 %v542, %v560
  %562 = vmatmul.bf16.gmra.mxu0 %v187
  %v563 = vpop.f32.mrf.mxu0
  %v564 = vadd.f32 %v545, %v563
  %v565 = vpop.f32.mrf.mxu0
  %v566 = vadd.f32 %v547, %v565
  %567 = vdwg.mxu0
  %568 = vmatpush.bf16.msra.mxu0 %v435
  %569 = vmatpush.bf16.msra.mxu0 %v434
  %570 = vmatpush.bf16.msra.mxu0 %v433
  %571 = vmatpush.bf16.msra.mxu0 %v432
  %572 = vmatpush.bf16.msra.mxu0 %v431
  %573 = vmatpush.bf16.msra.mxu0 %v430
  %574 = vmatpush.bf16.msra.mxu0 %v429
  %575 = vmatpush.bf16.msra.mxu0 %v428
  %576 = vmatmul.bf16.gmra.mxu0 %v181
  %v577 = vpop.f32.mrf.mxu0
  %v578 = vadd.f32 %v559, %v577
  %v579 = vpop.f32.mrf.mxu0
  %v580 = vadd.f32 %v561, %v579
  %581 = vmatmul.bf16.gmra.mxu0 %v188
  %v582 = vpop.f32.mrf.mxu0
  %v583 = vadd.f32 %v564, %v582
  %v584 = vpop.f32.mrf.mxu0
  %v585 = vadd.f32 %v566, %v584
  %586 = vdwg.mxu0
  %587 = vmatpush.bf16.msra.mxu0 %v443
  %588 = vmatpush.bf16.msra.mxu0 %v442
  %589 = vmatpush.bf16.msra.mxu0 %v441
  %590 = vmatpush.bf16.msra.mxu0 %v440
  %591 = vmatpush.bf16.msra.mxu0 %v439
  %592 = vmatpush.bf16.msra.mxu0 %v438
  %593 = vmatpush.bf16.msra.mxu0 %v437
  %594 = vmatpush.bf16.msra.mxu0 %v436
  %595 = vmatmul.bf16.gmra.mxu0 %v182
  %v596 = vpop.f32.mrf.mxu0
  %v597 = vadd.f32 %v578, %v596
  %v598 = vpop.f32.mrf.mxu0
  %v599 = vadd.f32 %v580, %v598
  %600 = vmatmul.bf16.gmra.mxu0 %v189
  %v601 = vpop.f32.mrf.mxu0
  %v602 = vadd.f32 %v583, %v601
  %v603 = vpop.f32.mrf.mxu0
  %v604 = vadd.f32 %v585, %v603
  %605 = vdwg.mxu0
  %606 = vmatpush.bf16.msra.mxu0 %v451
  %607 = vmatpush.bf16.msra.mxu0 %v450
  %608 = vmatpush.bf16.msra.mxu0 %v449
  %609 = vmatpush.bf16.msra.mxu0 %v448
  %610 = vmatpush.bf16.msra.mxu0 %v447
  %611 = vmatpush.bf16.msra.mxu0 %v446
  %612 = vmatpush.bf16.msra.mxu0 %v445
  %613 = vmatpush.bf16.msra.mxu0 %v444
  %614 = vmatmul.bf16.gmra.mxu0 %v183
  %v615 = vpop.f32.mrf.mxu0
  %v616 = vadd.f32 %v597, %v615
  %v617 = vpop.f32.mrf.mxu0
  %v618 = vadd.f32 %v599, %v617
  %619 = vmatmul.bf16.gmra.mxu0 %v190
  %v620 = vpop.f32.mrf.mxu0
  %v621 = vadd.f32 %v602, %v620
  %v622 = vpop.f32.mrf.mxu0
  %v623 = vadd.f32 %v604, %v622
  %624 = vdwg.mxu0
  %625 = vmatpush.bf16.msra.mxu0 0
  %626 = vmatpush.bf16.msra.mxu0 0
  %627 = vmatpush.bf16.msra.mxu0 0
  %628 = vmatpush.bf16.msra.mxu0 0
  %629 = vmatpush.bf16.msra.mxu0 0
  %630 = vmatpush.bf16.msra.mxu0 0
  %631 = vmatpush.bf16.msra.mxu0 %v453
  %632 = vmatpush.bf16.msra.mxu0 %v452
  %633 = vmatmul.bf16.gmra.mxu0 %v506
  %v634 = vpop.f32.mrf.mxu0
  %v635 = vadd.f32 %v616, %v634
  %v636 = vpop.f32.mrf.mxu0
  %v637 = vadd.f32 %v618, %v636
  %638 = vmatmul.bf16.gmra.mxu0 %v509
  %v639 = vpop.f32.mrf.mxu0
  %v640 = vadd.f32 %v621, %v639
  %v641 = vpop.f32.mrf.mxu0
  %v642 = vadd.f32 %v623, %v641
  %643 = vdwg.mxu0
  %v644 = vld [vmem:[%s1] sm:$0xff]
  %v645 = vld [vmem:[%s1 + $0x8] sm:$0xff]
  %v646 = vld [vmem:[%s1 + $0x10] sm:$0xff]
  %v647 = vld [vmem:[%s1 + $0x18] sm:$0xff]
  %649 = vset.pattern.permute.xlu0 0
  %650 = vperm.xlu0 %649, %v644
  %v651 = vpop.permute.xlu0 %650
  %654 = vset.pattern.permute.xlu0 0
  %655 = vperm.xlu0 %654, %v645
  %v656 = vpop.permute.xlu0 %655
  %659 = vset.pattern.permute.xlu0 0
  %660 = vperm.xlu0 %659, %v646
  %v661 = vpop.permute.xlu0 %660
  %664 = vset.pattern.permute.xlu0 0
  %665 = vperm.xlu0 %664, %v647
  %v666 = vpop.permute.xlu0 %665
  %v668 = vmul.f32 %v635, %v651
  %v669 = vmul.f32 %v637, %v656
  %v670 = vmul.f32 %v640, %v661
  %v671 = vmul.f32 %v642, %v666
  %v672 = vld [vmem:[%s2] sm:$0xff]
  %v673 = vld [vmem:[%s2 + $0x8] sm:$0xff]
  %v674 = vld [vmem:[%s2 + $0x10] sm:$0xff]
  %v675 = vld [vmem:[%s2 + $0x18] sm:$0xff]
  %677 = vset.pattern.permute.xlu0 0
  %678 = vperm.xlu0 %677, %v672
  %v679 = vpop.permute.xlu0 %678
  %682 = vset.pattern.permute.xlu0 0
  %683 = vperm.xlu0 %682, %v673
  %v684 = vpop.permute.xlu0 %683
  %687 = vset.pattern.permute.xlu0 0
  %688 = vperm.xlu0 %687, %v674
  %v689 = vpop.permute.xlu0 %688
  %692 = vset.pattern.permute.xlu0 0
  %693 = vperm.xlu0 %692, %v675
  %v694 = vpop.permute.xlu0 %693
  %v696 = vadd.f32 %v668, %v679
  %v697 = vadd.f32 %v669, %v684
  %v698 = vadd.f32 %v670, %v689
  %v699 = vadd.f32 %v671, %v694
  %700 = vst [vmem:[%s4] sm:$0xff] %v696
  %701 = vst [vmem:[%s4 + $0x8] sm:$0xff] %v697
  %702 = vst [vmem:[%s4 + $0x10] sm:$0xff] %v698
  %703 = vst [vmem:[%s4 + $0x18] sm:$0xff] %v699
  // Predicated region
  $region18: #{feature_extractor_pallas.16} parent=0 // pred_check
    _
  $region19: #{feature_extractor_pallas.16} parent=0 // pred_check_branch
    %705 = sbr.rel (0) target = $region21
  $region20: #{feature_extractor_pallas.16} parent=0 // pred_region
    _
  $region21: #{feature_extractor_pallas.16} parent=0 // pred_fallthru
    _
  // Predicated region
  $region22: #{feature_extractor_pallas.16} parent=0 // pred_check
    _
  $region23: #{feature_extractor_pallas.16} parent=0 // pred_check_branch
    %707 = sbr.rel (0) target = $region25
  $region24: #{feature_extractor_pallas.16} parent=0 // pred_region
    _
  $region25: #{feature_extractor_pallas.16} parent=0 // pred_fallthru
    _

// kernel: feature_extractor_pallas.17
$region0: #{feature_extractor_pallas.17}
  #allocation0 [shape = 'u32[]', space=smem, size = 0x4, offset = 0x4, fixed_abs, tag = 'smem constant byte address 0x4 - core index']
  #allocation1 [shape = 'u32[72,128]{1,0:T(1,128)}', space=vmem, size = 0x9000, scoped, tag = 'internal scratch']
  %s0 = inlined_call_operand.vmem [shape: bf16[32,288], index: 0, kind: input, shape index: {}]
  %s1 = inlined_call_operand.vmem [shape: f32[32,1], index: 1, kind: input, shape index: {}]
  %s2 = inlined_call_operand.vmem [shape: f32[32,1], index: 2, kind: input, shape index: {}]
  %s3 = inlined_call_operand.vmem [shape: bf16[288,128], index: 3, kind: input, shape index: {}]
  %s4 = inlined_call_operand.vmem [shape: f32[32,128], index: 4, kind: output, shape index: {}]
  %s5 = sld [smem:[#allocation0]]
  $region26: #{feature_extractor_pallas.17} parent=0
    _
  %s7 = ssub.s32 1, %s5
  %s8 = scalar_select 0, %s7, %s5
  // Predicated region
  $region2: #{feature_extractor_pallas.17} parent=0 // pred_check
    _
  $region3: #{feature_extractor_pallas.17} parent=0 // pred_check_branch
    %10 = sbr.rel (0) target = $region5
  $region4: #{feature_extractor_pallas.17} parent=0 // pred_region
    _
  $region5: #{feature_extractor_pallas.17} parent=0 // pred_fallthru
    _
  // Predicated region
  $region6: #{feature_extractor_pallas.17} parent=0 // pred_check
    _
  $region7: #{feature_extractor_pallas.17} parent=0 // pred_check_branch
    %12 = sbr.rel (0) target = $region9
  $region8: #{feature_extractor_pallas.17} parent=0 // pred_region
    _
  $region9: #{feature_extractor_pallas.17} parent=0 // pred_fallthru
    _
  // Predicated region
  $region10: #{feature_extractor_pallas.17} parent=0 // pred_check
    _
  $region11: #{feature_extractor_pallas.17} parent=0 // pred_check_branch
    %14 = sbr.rel (0) target = $region13
  $region12: #{feature_extractor_pallas.17} parent=0 // pred_region
    _
  $region13: #{feature_extractor_pallas.17} parent=0 // pred_fallthru
    _
  // Predicated region
  $region14: #{feature_extractor_pallas.17} parent=0 // pred_check
    _
  $region15: #{feature_extractor_pallas.17} parent=0 // pred_check_branch
    %16 = sbr.rel (0) target = $region17
  $region16: #{feature_extractor_pallas.17} parent=0 // pred_region
    _
  $region17: #{feature_extractor_pallas.17} parent=0 // pred_fallthru
    _
  %v18 = vld [vmem:[%s0] sm:$0xff]
  %v19 = vld [vmem:[%s0 + $0x8] sm:$0xf]
  %v20 = vld [vmem:[%s0 + $0xc] sm:$0xff]
  %v21 = vld [vmem:[%s0 + $0x14] sm:$0xf]
  %v22 = vld [vmem:[%s0 + $0x18] sm:$0xff]
  %v23 = vld [vmem:[%s0 + $0x20] sm:$0xf]
  %v24 = vld [vmem:[%s0 + $0x24] sm:$0xff]
  %v25 = vld [vmem:[%s0 + $0x2c] sm:$0xf]
  %v26 = vld [vmem:[%s3] sm:$0xf]
  %v27 = vld [vmem:[%s3 + $0x4] sm:$0xf]
  %v28 = vld [vmem:[%s3 + $0x8] sm:$0xf]
  %v29 = vld [vmem:[%s3 + $0xc] sm:$0xf]
  %v30 = vld [vmem:[%s3 + $0x10] sm:$0xf]
  %v31 = vld [vmem:[%s3 + $0x14] sm:$0xf]
  %v32 = vld [vmem:[%s3 + $0x18] sm:$0xf]
  %v33 = vld [vmem:[%s3 + $0x1c] sm:$0xf]
  %v34 = vld [vmem:[%s3 + $0x20] sm:$0xf]
  %v35 = vld [vmem:[%s3 + $0x24] sm:$0xf]
  %v36 = vld [vmem:[%s3 + $0x28] sm:$0xf]
  %v37 = vld [vmem:[%s3 + $0x2c] sm:$0xf]
  %v38 = vld [vmem:[%s3 + $0x30] sm:$0xf]
  %v39 = vld [vmem:[%s3 + $0x34] sm:$0xf]
  %v40 = vld [vmem:[%s3 + $0x38] sm:$0xf]
  %v41 = vld [vmem:[%s3 + $0x3c] sm:$0xf]
  %v42 = vld [vmem:[%s3 + $0x40] sm:$0xf]
  %v43 = vld [vmem:[%s3 + $0x44] sm:$0xf]
  %v44 = vld [vmem:[%s3 + $0x48] sm:$0xf]
  %v45 = vld [vmem:[%s3 + $0x4c] sm:$0xf]
  %v46 = vld [vmem:[%s3 + $0x50] sm:$0xf]
  %v47 = vld [vmem:[%s3 + $0x54] sm:$0xf]
  %v48 = vld [vmem:[%s3 + $0x58] sm:$0xf]
  %v49 = vld [vmem:[%s3 + $0x5c] sm:$0xf]
  %v50 = vld [vmem:[%s3 + $0x60] sm:$0xf]
  %v51 = vld [vmem:[%s3 + $0x64] sm:$0xf]
  %v52 = vld [vmem:[%s3 + $0x68] sm:$0xf]
  %v53 = vld [vmem:[%s3 + $0x6c] sm:$0xf]
  %v54 = vld [vmem:[%s3 + $0x70] sm:$0xf]
  %v55 = vld [vmem:[%s3 + $0x74] sm:$0xf]
  %v56 = vld [vmem:[%s3 + $0x78] sm:$0xf]
  %v57 = vld [vmem:[%s3 + $0x7c] sm:$0xf]
  %v58 = vld [vmem:[%s3 + $0x80] sm:$0xf]
  %v59 = vld [vmem:[%s3 + $0x84] sm:$0xf]
  %v60 = vld [vmem:[%s3 + $0x88] sm:$0xf]
  %v61 = vld [vmem:[%s3 + $0x8c] sm:$0xf]
  %v70 = vunpack.c.l.b16 %v18
  %v71 = vunpack.c.h.b16 %v18
  %v72 = vunpack.c.l.b16 %v19
  %v73 = vunpack.c.l.b16 %v20
  %v74 = vunpack.c.h.b16 %v20
  %v75 = vunpack.c.l.b16 %v21
  %v76 = vunpack.c.l.b16 %v22
  %v77 = vunpack.c.h.b16 %v22
  %v78 = vunpack.c.l.b16 %v23
  %v79 = vunpack.c.l.b16 %v24
  %v80 = vunpack.c.h.b16 %v24
  %v81 = vunpack.c.l.b16 %v25
  %v82 = vpack.c.b16 %v73, %v70
  %v83 = vpack.c.b16 %v74, %v71
  %v84 = vpack.c.b16 %v75, %v72
  %v85 = vpack.c.b16 %v79, %v76
  %v86 = vpack.c.b16 %v80, %v77
  %v87 = vpack.c.b16 %v81, %v78
  %v128 = vunpack.c.l.b16 %v26
  %v129 = vunpack.c.l.b16 %v27
  %v130 = vunpack.c.l.b16 %v28
  %v131 = vunpack.c.l.b16 %v29
  %v132 = vunpack.c.l.b16 %v30
  %v133 = vunpack.c.l.b16 %v31
  %v134 = vunpack.c.l.b16 %v32
  %v135 = vunpack.c.l.b16 %v33
  %v136 = vunpack.c.l.b16 %v34
  %v137 = vunpack.c.l.b16 %v35
  %v138 = vunpack.c.l.b16 %v36
  %v139 = vunpack.c.l.b16 %v37
  %v140 = vunpack.c.l.b16 %v38
  %v141 = vunpack.c.l.b16 %v39
  %v142 = vunpack.c.l.b16 %v40
  %v143 = vunpack.c.l.b16 %v41
  %v144 = vunpack.c.l.b16 %v42
  %v145 = vunpack.c.l.b16 %v43
  %v146 = vunpack.c.l.b16 %v44
  %v147 = vunpack.c.l.b16 %v45
  %v148 = vunpack.c.l.b16 %v46
  %v149 = vunpack.c.l.b16 %v47
  %v150 = vunpack.c.l.b16 %v48
  %v151 = vunpack.c.l.b16 %v49
  %v152 = vunpack.c.l.b16 %v50
  %v153 = vunpack.c.l.b16 %v51
  %v154 = vunpack.c.l.b16 %v52
  %v155 = vunpack.c.l.b16 %v53
  %v156 = vunpack.c.l.b16 %v54
  %v157 = vunpack.c.l.b16 %v55
  %v158 = vunpack.c.l.b16 %v56
  %v159 = vunpack.c.l.b16 %v57
  %v160 = vunpack.c.l.b16 %v58
  %v161 = vunpack.c.l.b16 %v59
  %v162 = vunpack.c.l.b16 %v60
  %v163 = vunpack.c.l.b16 %v61
  %v164 = vpack.c.b16 %v129, %v128
  %v165 = vpack.c.b16 %v131, %v130
  %v166 = vpack.c.b16 %v133, %v132
  %v167 = vpack.c.b16 %v135, %v134
  %v168 = vpack.c.b16 %v137, %v136
  %v169 = vpack.c.b16 %v139, %v138
  %v170 = vpack.c.b16 %v141, %v140
  %v171 = vpack.c.b16 %v143, %v142
  %v172 = vpack.c.b16 %v145, %v144
  %v173 = vpack.c.b16 %v147, %v146
  %v174 = vpack.c.b16 %v149, %v148
  %v175 = vpack.c.b16 %v151, %v150
  %v176 = vpack.c.b16 %v153, %v152
  %v177 = vpack.c.b16 %v155, %v154
  %v178 = vpack.c.b16 %v157, %v156
  %v179 = vpack.c.b16 %v159, %v158
  %v180 = vpack.c.b16 %v161, %v160
  %v181 = vpack.c.b16 %v163, %v162
  %vm200 = vcmask 261120
  %v202 = vsel %vm200, %v84, 0
  %v205 = vsel %vm200, %v87, 0
  %207 = vmatpush.bf16.msra.mxu0 %v171
  %208 = vmatpush.bf16.msra.mxu0 %v170
  %209 = vmatpush.bf16.msra.mxu0 %v169
  %210 = vmatpush.bf16.msra.mxu0 %v168
  %211 = vmatpush.bf16.msra.mxu0 %v167
  %212 = vmatpush.bf16.msra.mxu0 %v166
  %213 = vmatpush.bf16.msra.mxu0 %v165
  %214 = vmatpush.bf16.msra.mxu0 %v164
  %215 = vmatmul.bf16.gmra.mxu0 %v82
  %v216 = vpop.f32.mrf.mxu0
  %v217 = vadd.f32 0.0, %v216
  %v218 = vpop.f32.mrf.mxu0
  %v219 = vadd.f32 0.0, %v218
  %220 = vmatmul.bf16.gmra.mxu0 %v85
  %v221 = vpop.f32.mrf.mxu0
  %v222 = vadd.f32 0.0, %v221
  %v223 = vpop.f32.mrf.mxu0
  %v224 = vadd.f32 0.0, %v223
  %225 = vdwg.mxu0
  %226 = vmatpush.bf16.msra.mxu0 %v179
  %227 = vmatpush.bf16.msra.mxu0 %v178
  %228 = vmatpush.bf16.msra.mxu0 %v177
  %229 = vmatpush.bf16.msra.mxu0 %v176
  %230 = vmatpush.bf16.msra.mxu0 %v175
  %231 = vmatpush.bf16.msra.mxu0 %v174
  %232 = vmatpush.bf16.msra.mxu0 %v173
  %233 = vmatpush.bf16.msra.mxu0 %v172
  %234 = vmatmul.bf16.gmra.mxu0 %v83
  %v235 = vpop.f32.mrf.mxu0
  %v236 = vadd.f32 %v217, %v235
  %v237 = vpop.f32.mrf.mxu0
  %v238 = vadd.f32 %v219, %v237
  %239 = vmatmul.bf16.gmra.mxu0 %v86
  %v240 = vpop.f32.mrf.mxu0
  %v241 = vadd.f32 %v222, %v240
  %v242 = vpop.f32.mrf.mxu0
  %v243 = vadd.f32 %v224, %v242
  %244 = vdwg.mxu0
  %245 = vmatpush.bf16.msra.mxu0 0
  %246 = vmatpush.bf16.msra.mxu0 0
  %247 = vmatpush.bf16.msra.mxu0 0
  %248 = vmatpush.bf16.msra.mxu0 0
  %249 = vmatpush.bf16.msra.mxu0 0
  %250 = vmatpush.bf16.msra.mxu0 0
  %251 = vmatpush.bf16.msra.mxu0 %v181
  %252 = vmatpush.bf16.msra.mxu0 %v180
  %253 = vmatmul.bf16.gmra.mxu0 %v202
  %v254 = vpop.f32.mrf.mxu0
  %v255 = vadd.f32 %v236, %v254
  %v256 = vpop.f32.mrf.mxu0
  %v257 = vadd.f32 %v238, %v256
  %258 = vmatmul.bf16.gmra.mxu0 %v205
  %v259 = vpop.f32.mrf.mxu0
  %v260 = vadd.f32 %v241, %v259
  %v261 = vpop.f32.mrf.mxu0
  %v262 = vadd.f32 %v243, %v261
  %263 = vdwg.mxu0
  %v264 = vld [vmem:[%s1] sm:$0xff]
  %v265 = vld [vmem:[%s1 + $0x8] sm:$0xff]
  %v266 = vld [vmem:[%s1 + $0x10] sm:$0xff]
  %v267 = vld [vmem:[%s1 + $0x18] sm:$0xff]
  %269 = vset.pattern.permute.xlu0 0
  %270 = vperm.xlu0 %269, %v264
  %v271 = vpop.permute.xlu0 %270
  %274 = vset.pattern.permute.xlu0 0
  %275 = vperm.xlu0 %274, %v265
  %v276 = vpop.permute.xlu0 %275
  %279 = vset.pattern.permute.xlu0 0
  %280 = vperm.xlu0 %279, %v266
  %v281 = vpop.permute.xlu0 %280
  %284 = vset.pattern.permute.xlu0 0
  %285 = vperm.xlu0 %284, %v267
  %v286 = vpop.permute.xlu0 %285
  %v288 = vmul.f32 %v255, %v271
  %v289 = vmul.f32 %v257, %v276
  %v290 = vmul.f32 %v260, %v281
  %v291 = vmul.f32 %v262, %v286
  %v292 = vld [vmem:[%s2] sm:$0xff]
  %v293 = vld [vmem:[%s2 + $0x8] sm:$0xff]
  %v294 = vld [vmem:[%s2 + $0x10] sm:$0xff]
  %v295 = vld [vmem:[%s2 + $0x18] sm:$0xff]
  %297 = vset.pattern.permute.xlu0 0
  %298 = vperm.xlu0 %297, %v292
  %v299 = vpop.permute.xlu0 %298
  %302 = vset.pattern.permute.xlu0 0
  %303 = vperm.xlu0 %302, %v293
  %v304 = vpop.permute.xlu0 %303
  %307 = vset.pattern.permute.xlu0 0
  %308 = vperm.xlu0 %307, %v294
  %v309 = vpop.permute.xlu0 %308
  %312 = vset.pattern.permute.xlu0 0
  %313 = vperm.xlu0 %312, %v295
  %v314 = vpop.permute.xlu0 %313
  %v316 = vadd.f32 %v288, %v299
  %v317 = vadd.f32 %v289, %v304
  %v318 = vadd.f32 %v290, %v309
  %v319 = vadd.f32 %v291, %v314
  %vm320 = vcmp.gt.f32.partialorder %v316, 0.0
  %vm321 = vcmp.gt.f32.partialorder %v317, 0.0
  %vm322 = vcmp.gt.f32.partialorder %v318, 0.0
  %vm323 = vcmp.gt.f32.partialorder %v319, 0.0
  %v324 = vmul.f32 %v316, 0.2
  %v325 = vmul.f32 %v317, 0.2
  %v326 = vmul.f32 %v318, 0.2
  %v327 = vmul.f32 %v319, 0.2
  %v328 = vsel %vm320, %v316, %v324
  %v329 = vsel %vm321, %v317, %v325
  %v330 = vsel %vm322, %v318, %v326
  %v331 = vsel %vm323, %v319, %v327
  %332 = vst [vmem:[%s4] sm:$0xff] %v328
  %333 = vst [vmem:[%s4 + $0x8] sm:$0xff] %v329
  %334 = vst [vmem:[%s4 + $0x10] sm:$0xff] %v330
  %335 = vst [vmem:[%s4 + $0x18] sm:$0xff] %v331
  // Predicated region
  $region18: #{feature_extractor_pallas.17} parent=0 // pred_check
    _
  $region19: #{feature_extractor_pallas.17} parent=0 // pred_check_branch
    %337 = sbr.rel (0) target = $region21
  $region20: #{feature_extractor_pallas.17} parent=0 // pred_region
    _
  $region21: #{feature_extractor_pallas.17} parent=0 // pred_fallthru
    _
  // Predicated region
  $region22: #{feature_extractor_pallas.17} parent=0 // pred_check
    _
  $region23: #{feature_extractor_pallas.17} parent=0 // pred_check_branch
    %339 = sbr.rel (0) target = $region25
  $region24: #{feature_extractor_pallas.17} parent=0 // pred_region
    _
  $region25: #{feature_extractor_pallas.17} parent=0 // pred_fallthru
    _

// kernel: feature_extractor_pallas.29
$region0: #{feature_extractor_pallas.29}
  #allocation0 [shape = 'u32[]', space=smem, size = 0x4, offset = 0x4, fixed_abs, tag = 'smem constant byte address 0x4 - core index']
  #allocation1 [shape = 'u32[72,128]{1,0:T(1,128)}', space=vmem, size = 0x9000, scoped, tag = 'internal scratch']
  %s0 = inlined_call_operand.vmem [shape: bf16[32,288], index: 0, kind: input, shape index: {}]
  %s1 = inlined_call_operand.vmem [shape: f32[32,1], index: 1, kind: input, shape index: {}]
  %s2 = inlined_call_operand.vmem [shape: f32[32,1], index: 2, kind: input, shape index: {}]
  %s3 = inlined_call_operand.vmem [shape: bf16[288,128], index: 3, kind: input, shape index: {}]
  %s4 = inlined_call_operand.vmem [shape: f32[32,128], index: 4, kind: output, shape index: {}]
  %s5 = sld [smem:[#allocation0]]
  $region26: #{feature_extractor_pallas.29} parent=0
    _
  %s7 = ssub.s32 1, %s5
  %s8 = scalar_select 0, %s7, %s5
  // Predicated region
  $region2: #{feature_extractor_pallas.29} parent=0 // pred_check
    _
  $region3: #{feature_extractor_pallas.29} parent=0 // pred_check_branch
    %10 = sbr.rel (0) target = $region5
  $region4: #{feature_extractor_pallas.29} parent=0 // pred_region
    _
  $region5: #{feature_extractor_pallas.29} parent=0 // pred_fallthru
    _
  // Predicated region
  $region6: #{feature_extractor_pallas.29} parent=0 // pred_check
    _
  $region7: #{feature_extractor_pallas.29} parent=0 // pred_check_branch
    %12 = sbr.rel (0) target = $region9
  $region8: #{feature_extractor_pallas.29} parent=0 // pred_region
    _
  $region9: #{feature_extractor_pallas.29} parent=0 // pred_fallthru
    _
  // Predicated region
  $region10: #{feature_extractor_pallas.29} parent=0 // pred_check
    _
  $region11: #{feature_extractor_pallas.29} parent=0 // pred_check_branch
    %14 = sbr.rel (0) target = $region13
  $region12: #{feature_extractor_pallas.29} parent=0 // pred_region
    _
  $region13: #{feature_extractor_pallas.29} parent=0 // pred_fallthru
    _
  // Predicated region
  $region14: #{feature_extractor_pallas.29} parent=0 // pred_check
    _
  $region15: #{feature_extractor_pallas.29} parent=0 // pred_check_branch
    %16 = sbr.rel (0) target = $region17
  $region16: #{feature_extractor_pallas.29} parent=0 // pred_region
    _
  $region17: #{feature_extractor_pallas.29} parent=0 // pred_fallthru
    _
  %v18 = vld [vmem:[%s0] sm:$0xff]
  %v19 = vld [vmem:[%s0 + $0x8] sm:$0xf]
  %v20 = vld [vmem:[%s0 + $0xc] sm:$0xff]
  %v21 = vld [vmem:[%s0 + $0x14] sm:$0xf]
  %v22 = vld [vmem:[%s0 + $0x18] sm:$0xff]
  %v23 = vld [vmem:[%s0 + $0x20] sm:$0xf]
  %v24 = vld [vmem:[%s0 + $0x24] sm:$0xff]
  %v25 = vld [vmem:[%s0 + $0x2c] sm:$0xf]
  %v26 = vld [vmem:[%s3] sm:$0xf]
  %v27 = vld [vmem:[%s3 + $0x4] sm:$0xf]
  %v28 = vld [vmem:[%s3 + $0x8] sm:$0xf]
  %v29 = vld [vmem:[%s3 + $0xc] sm:$0xf]
  %v30 = vld [vmem:[%s3 + $0x10] sm:$0xf]
  %v31 = vld [vmem:[%s3 + $0x14] sm:$0xf]
  %v32 = vld [vmem:[%s3 + $0x18] sm:$0xf]
  %v33 = vld [vmem:[%s3 + $0x1c] sm:$0xf]
  %v34 = vld [vmem:[%s3 + $0x20] sm:$0xf]
  %v35 = vld [vmem:[%s3 + $0x24] sm:$0xf]
  %v36 = vld [vmem:[%s3 + $0x28] sm:$0xf]
  %v37 = vld [vmem:[%s3 + $0x2c] sm:$0xf]
  %v38 = vld [vmem:[%s3 + $0x30] sm:$0xf]
  %v39 = vld [vmem:[%s3 + $0x34] sm:$0xf]
  %v40 = vld [vmem:[%s3 + $0x38] sm:$0xf]
  %v41 = vld [vmem:[%s3 + $0x3c] sm:$0xf]
  %v42 = vld [vmem:[%s3 + $0x40] sm:$0xf]
  %v43 = vld [vmem:[%s3 + $0x44] sm:$0xf]
  %v44 = vld [vmem:[%s3 + $0x48] sm:$0xf]
  %v45 = vld [vmem:[%s3 + $0x4c] sm:$0xf]
  %v46 = vld [vmem:[%s3 + $0x50] sm:$0xf]
  %v47 = vld [vmem:[%s3 + $0x54] sm:$0xf]
  %v48 = vld [vmem:[%s3 + $0x58] sm:$0xf]
  %v49 = vld [vmem:[%s3 + $0x5c] sm:$0xf]
  %v50 = vld [vmem:[%s3 + $0x60] sm:$0xf]
  %v51 = vld [vmem:[%s3 + $0x64] sm:$0xf]
  %v52 = vld [vmem:[%s3 + $0x68] sm:$0xf]
  %v53 = vld [vmem:[%s3 + $0x6c] sm:$0xf]
  %v54 = vld [vmem:[%s3 + $0x70] sm:$0xf]
  %v55 = vld [vmem:[%s3 + $0x74] sm:$0xf]
  %v56 = vld [vmem:[%s3 + $0x78] sm:$0xf]
  %v57 = vld [vmem:[%s3 + $0x7c] sm:$0xf]
  %v58 = vld [vmem:[%s3 + $0x80] sm:$0xf]
  %v59 = vld [vmem:[%s3 + $0x84] sm:$0xf]
  %v60 = vld [vmem:[%s3 + $0x88] sm:$0xf]
  %v61 = vld [vmem:[%s3 + $0x8c] sm:$0xf]
  %v70 = vunpack.c.l.b16 %v18
  %v71 = vunpack.c.h.b16 %v18
  %v72 = vunpack.c.l.b16 %v19
  %v73 = vunpack.c.l.b16 %v20
  %v74 = vunpack.c.h.b16 %v20
  %v75 = vunpack.c.l.b16 %v21
  %v76 = vunpack.c.l.b16 %v22
  %v77 = vunpack.c.h.b16 %v22
  %v78 = vunpack.c.l.b16 %v23
  %v79 = vunpack.c.l.b16 %v24
  %v80 = vunpack.c.h.b16 %v24
  %v81 = vunpack.c.l.b16 %v25
  %v82 = vpack.c.b16 %v73, %v70
  %v83 = vpack.c.b16 %v74, %v71
  %v84 = vpack.c.b16 %v75, %v72
  %v85 = vpack.c.b16 %v79, %v76
  %v86 = vpack.c.b16 %v80, %v77
  %v87 = vpack.c.b16 %v81, %v78
  %v128 = vunpack.c.l.b16 %v26
  %v129 = vunpack.c.l.b16 %v27
  %v130 = vunpack.c.l.b16 %v28
  %v131 = vunpack.c.l.b16 %v29
  %v132 = vunpack.c.l.b16 %v30
  %v133 = vunpack.c.l.b16 %v31
  %v134 = vunpack.c.l.b16 %v32
  %v135 = vunpack.c.l.b16 %v33
  %v136 = vunpack.c.l.b16 %v34
  %v137 = vunpack.c.l.b16 %v35
  %v138 = vunpack.c.l.b16 %v36
  %v139 = vunpack.c.l.b16 %v37
  %v140 = vunpack.c.l.b16 %v38
  %v141 = vunpack.c.l.b16 %v39
  %v142 = vunpack.c.l.b16 %v40
  %v143 = vunpack.c.l.b16 %v41
  %v144 = vunpack.c.l.b16 %v42
  %v145 = vunpack.c.l.b16 %v43
  %v146 = vunpack.c.l.b16 %v44
  %v147 = vunpack.c.l.b16 %v45
  %v148 = vunpack.c.l.b16 %v46
  %v149 = vunpack.c.l.b16 %v47
  %v150 = vunpack.c.l.b16 %v48
  %v151 = vunpack.c.l.b16 %v49
  %v152 = vunpack.c.l.b16 %v50
  %v153 = vunpack.c.l.b16 %v51
  %v154 = vunpack.c.l.b16 %v52
  %v155 = vunpack.c.l.b16 %v53
  %v156 = vunpack.c.l.b16 %v54
  %v157 = vunpack.c.l.b16 %v55
  %v158 = vunpack.c.l.b16 %v56
  %v159 = vunpack.c.l.b16 %v57
  %v160 = vunpack.c.l.b16 %v58
  %v161 = vunpack.c.l.b16 %v59
  %v162 = vunpack.c.l.b16 %v60
  %v163 = vunpack.c.l.b16 %v61
  %v164 = vpack.c.b16 %v129, %v128
  %v165 = vpack.c.b16 %v131, %v130
  %v166 = vpack.c.b16 %v133, %v132
  %v167 = vpack.c.b16 %v135, %v134
  %v168 = vpack.c.b16 %v137, %v136
  %v169 = vpack.c.b16 %v139, %v138
  %v170 = vpack.c.b16 %v141, %v140
  %v171 = vpack.c.b16 %v143, %v142
  %v172 = vpack.c.b16 %v145, %v144
  %v173 = vpack.c.b16 %v147, %v146
  %v174 = vpack.c.b16 %v149, %v148
  %v175 = vpack.c.b16 %v151, %v150
  %v176 = vpack.c.b16 %v153, %v152
  %v177 = vpack.c.b16 %v155, %v154
  %v178 = vpack.c.b16 %v157, %v156
  %v179 = vpack.c.b16 %v159, %v158
  %v180 = vpack.c.b16 %v161, %v160
  %v181 = vpack.c.b16 %v163, %v162
  %vm200 = vcmask 261120
  %v202 = vsel %vm200, %v84, 0
  %v205 = vsel %vm200, %v87, 0
  %207 = vmatpush.bf16.msra.mxu0 %v171
  %208 = vmatpush.bf16.msra.mxu0 %v170
  %209 = vmatpush.bf16.msra.mxu0 %v169
  %210 = vmatpush.bf16.msra.mxu0 %v168
  %211 = vmatpush.bf16.msra.mxu0 %v167
  %212 = vmatpush.bf16.msra.mxu0 %v166
  %213 = vmatpush.bf16.msra.mxu0 %v165
  %214 = vmatpush.bf16.msra.mxu0 %v164
  %215 = vmatmul.bf16.gmra.mxu0 %v82
  %v216 = vpop.f32.mrf.mxu0
  %v217 = vadd.f32 0.0, %v216
  %v218 = vpop.f32.mrf.mxu0
  %v219 = vadd.f32 0.0, %v218
  %220 = vmatmul.bf16.gmra.mxu0 %v85
  %v221 = vpop.f32.mrf.mxu0
  %v222 = vadd.f32 0.0, %v221
  %v223 = vpop.f32.mrf.mxu0
  %v224 = vadd.f32 0.0, %v223
  %225 = vdwg.mxu0
  %226 = vmatpush.bf16.msra.mxu0 %v179
  %227 = vmatpush.bf16.msra.mxu0 %v178
  %228 = vmatpush.bf16.msra.mxu0 %v177
  %229 = vmatpush.bf16.msra.mxu0 %v176
  %230 = vmatpush.bf16.msra.mxu0 %v175
  %231 = vmatpush.bf16.msra.mxu0 %v174
  %232 = vmatpush.bf16.msra.mxu0 %v173
  %233 = vmatpush.bf16.msra.mxu0 %v172
  %234 = vmatmul.bf16.gmra.mxu0 %v83
  %v235 = vpop.f32.mrf.mxu0
  %v236 = vadd.f32 %v217, %v235
  %v237 = vpop.f32.mrf.mxu0
  %v238 = vadd.f32 %v219, %v237
  %239 = vmatmul.bf16.gmra.mxu0 %v86
  %v240 = vpop.f32.mrf.mxu0
  %v241 = vadd.f32 %v222, %v240
  %v242 = vpop.f32.mrf.mxu0
  %v243 = vadd.f32 %v224, %v242
  %244 = vdwg.mxu0
  %245 = vmatpush.bf16.msra.mxu0 0
  %246 = vmatpush.bf16.msra.mxu0 0
  %247 = vmatpush.bf16.msra.mxu0 0
  %248 = vmatpush.bf16.msra.mxu0 0
  %249 = vmatpush.bf16.msra.mxu0 0
  %250 = vmatpush.bf16.msra.mxu0 0
  %251 = vmatpush.bf16.msra.mxu0 %v181
  %252 = vmatpush.bf16.msra.mxu0 %v180
  %253 = vmatmul.bf16.gmra.mxu0 %v202
  %v254 = vpop.f32.mrf.mxu0
  %v255 = vadd.f32 %v236, %v254
  %v256 = vpop.f32.mrf.mxu0
  %v257 = vadd.f32 %v238, %v256
  %258 = vmatmul.bf16.gmra.mxu0 %v205
  %v259 = vpop.f32.mrf.mxu0
  %v260 = vadd.f32 %v241, %v259
  %v261 = vpop.f32.mrf.mxu0
  %v262 = vadd.f32 %v243, %v261
  %263 = vdwg.mxu0
  %v264 = vld [vmem:[%s1] sm:$0xff]
  %v265 = vld [vmem:[%s1 + $0x8] sm:$0xff]
  %v266 = vld [vmem:[%s1 + $0x10] sm:$0xff]
  %v267 = vld [vmem:[%s1 + $0x18] sm:$0xff]
  %269 = vset.pattern.permute.xlu0 0
  %270 = vperm.xlu0 %269, %v264
  %v271 = vpop.permute.xlu0 %270
  %274 = vset.pattern.permute.xlu0 0
  %275 = vperm.xlu0 %274, %v265
  %v276 = vpop.permute.xlu0 %275
  %279 = vset.pattern.permute.xlu0 0
  %280 = vperm.xlu0 %279, %v266
  %v281 = vpop.permute.xlu0 %280
  %284 = vset.pattern.permute.xlu0 0
  %285 = vperm.xlu0 %284, %v267
  %v286 = vpop.permute.xlu0 %285
  %v288 = vmul.f32 %v255, %v271
  %v289 = vmul.f32 %v257, %v276
  %v290 = vmul.f32 %v260, %v281
  %v291 = vmul.f32 %v262, %v286
  %v292 = vld [vmem:[%s2] sm:$0xff]
  %v293 = vld [vmem:[%s2 + $0x8] sm:$0xff]
  %v294 = vld [vmem:[%s2 + $0x10] sm:$0xff]
  %v295 = vld [vmem:[%s2 + $0x18] sm:$0xff]
  %297 = vset.pattern.permute.xlu0 0
  %298 = vperm.xlu0 %297, %v292
  %v299 = vpop.permute.xlu0 %298
  %302 = vset.pattern.permute.xlu0 0
  %303 = vperm.xlu0 %302, %v293
  %v304 = vpop.permute.xlu0 %303
  %307 = vset.pattern.permute.xlu0 0
  %308 = vperm.xlu0 %307, %v294
  %v309 = vpop.permute.xlu0 %308
  %312 = vset.pattern.permute.xlu0 0
  %313 = vperm.xlu0 %312, %v295
  %v314 = vpop.permute.xlu0 %313
  %v316 = vadd.f32 %v288, %v299
  %v317 = vadd.f32 %v289, %v304
  %v318 = vadd.f32 %v290, %v309
  %v319 = vadd.f32 %v291, %v314
  %320 = vst [vmem:[%s4] sm:$0xff] %v316
  %321 = vst [vmem:[%s4 + $0x8] sm:$0xff] %v317
  %322 = vst [vmem:[%s4 + $0x10] sm:$0xff] %v318
  %323 = vst [vmem:[%s4 + $0x18] sm:$0xff] %v319
  // Predicated region
  $region18: #{feature_extractor_pallas.29} parent=0 // pred_check
    _
  $region19: #{feature_extractor_pallas.29} parent=0 // pred_check_branch
    %325 = sbr.rel (0) target = $region21
  $region20: #{feature_extractor_pallas.29} parent=0 // pred_region
    _
  $region21: #{feature_extractor_pallas.29} parent=0 // pred_fallthru
    _
  // Predicated region
  $region22: #{feature_extractor_pallas.29} parent=0 // pred_check
    _
  $region23: #{feature_extractor_pallas.29} parent=0 // pred_check_branch
    %327 = sbr.rel (0) target = $region25
  $region24: #{feature_extractor_pallas.29} parent=0 // pred_region
    _
  $region25: #{feature_extractor_pallas.29} parent=0 // pred_fallthru
    _

// kernel: feature_extractor_pallas.18
$region0: #{feature_extractor_pallas.18}
  #allocation0 [shape = 'u32[]', space=smem, size = 0x4, offset = 0x4, fixed_abs, tag = 'smem constant byte address 0x4 - core index']
  #allocation1 [shape = 'u32[72,128]{1,0:T(1,128)}', space=vmem, size = 0x9000, scoped, tag = 'internal scratch']
  %s0 = inlined_call_operand.vmem [shape: bf16[32,288], index: 0, kind: input, shape index: {}]
  %s1 = inlined_call_operand.vmem [shape: f32[32,1], index: 1, kind: input, shape index: {}]
  %s2 = inlined_call_operand.vmem [shape: f32[32,1], index: 2, kind: input, shape index: {}]
  %s3 = inlined_call_operand.vmem [shape: bf16[288,128], index: 3, kind: input, shape index: {}]
  %s4 = inlined_call_operand.vmem [shape: f32[32,128], index: 4, kind: input, shape index: {}]
  %s5 = inlined_call_operand.vmem [shape: f32[32,128], index: 5, kind: output, shape index: {}]
  %s6 = sld [smem:[#allocation0]]
  $region30: #{feature_extractor_pallas.18} parent=0
    _
  %s8 = ssub.s32 1, %s6
  %s9 = scalar_select 0, %s8, %s6
  // Predicated region
  $region2: #{feature_extractor_pallas.18} parent=0 // pred_check
    _
  $region3: #{feature_extractor_pallas.18} parent=0 // pred_check_branch
    %11 = sbr.rel (0) target = $region5
  $region4: #{feature_extractor_pallas.18} parent=0 // pred_region
    _
  $region5: #{feature_extractor_pallas.18} parent=0 // pred_fallthru
    _
  // Predicated region
  $region6: #{feature_extractor_pallas.18} parent=0 // pred_check
    _
  $region7: #{feature_extractor_pallas.18} parent=0 // pred_check_branch
    %13 = sbr.rel (0) target = $region9
  $region8: #{feature_extractor_pallas.18} parent=0 // pred_region
    _
  $region9: #{feature_extractor_pallas.18} parent=0 // pred_fallthru
    _
  // Predicated region
  $region10: #{feature_extractor_pallas.18} parent=0 // pred_check
    _
  $region11: #{feature_extractor_pallas.18} parent=0 // pred_check_branch
    %15 = sbr.rel (0) target = $region13
  $region12: #{feature_extractor_pallas.18} parent=0 // pred_region
    _
  $region13: #{feature_extractor_pallas.18} parent=0 // pred_fallthru
    _
  // Predicated region
  $region14: #{feature_extractor_pallas.18} parent=0 // pred_check
    _
  $region15: #{feature_extractor_pallas.18} parent=0 // pred_check_branch
    %17 = sbr.rel (0) target = $region17
  $region16: #{feature_extractor_pallas.18} parent=0 // pred_region
    _
  $region17: #{feature_extractor_pallas.18} parent=0 // pred_fallthru
    _
  // Predicated region
  $region18: #{feature_extractor_pallas.18} parent=0 // pred_check
    _
  $region19: #{feature_extractor_pallas.18} parent=0 // pred_check_branch
    %19 = sbr.rel (0) target = $region21
  $region20: #{feature_extractor_pallas.18} parent=0 // pred_region
    _
  $region21: #{feature_extractor_pallas.18} parent=0 // pred_fallthru
    _
  %v21 = vld [vmem:[%s0] sm:$0xff]
  %v22 = vld [vmem:[%s0 + $0x8] sm:$0xf]
  %v23 = vld [vmem:[%s0 + $0xc] sm:$0xff]
  %v24 = vld [vmem:[%s0 + $0x14] sm:$0xf]
  %v25 = vld [vmem:[%s0 + $0x18] sm:$0xff]
  %v26 = vld [vmem:[%s0 + $0x20] sm:$0xf]
  %v27 = vld [vmem:[%s0 + $0x24] sm:$0xff]
  %v28 = vld [vmem:[%s0 + $0x2c] sm:$0xf]
  %v29 = vld [vmem:[%s3] sm:$0xf]
  %v30 = vld [vmem:[%s3 + $0x4] sm:$0xf]
  %v31 = vld [vmem:[%s3 + $0x8] sm:$0xf]
  %v32 = vld [vmem:[%s3 + $0xc] sm:$0xf]
  %v33 = vld [vmem:[%s3 + $0x10] sm:$0xf]
  %v34 = vld [vmem:[%s3 + $0x14] sm:$0xf]
  %v35 = vld [vmem:[%s3 + $0x18] sm:$0xf]
  %v36 = vld [vmem:[%s3 + $0x1c] sm:$0xf]
  %v37 = vld [vmem:[%s3 + $0x20] sm:$0xf]
  %v38 = vld [vmem:[%s3 + $0x24] sm:$0xf]
  %v39 = vld [vmem:[%s3 + $0x28] sm:$0xf]
  %v40 = vld [vmem:[%s3 + $0x2c] sm:$0xf]
  %v41 = vld [vmem:[%s3 + $0x30] sm:$0xf]
  %v42 = vld [vmem:[%s3 + $0x34] sm:$0xf]
  %v43 = vld [vmem:[%s3 + $0x38] sm:$0xf]
  %v44 = vld [vmem:[%s3 + $0x3c] sm:$0xf]
  %v45 = vld [vmem:[%s3 + $0x40] sm:$0xf]
  %v46 = vld [vmem:[%s3 + $0x44] sm:$0xf]
  %v47 = vld [vmem:[%s3 + $0x48] sm:$0xf]
  %v48 = vld [vmem:[%s3 + $0x4c] sm:$0xf]
  %v49 = vld [vmem:[%s3 + $0x50] sm:$0xf]
  %v50 = vld [vmem:[%s3 + $0x54] sm:$0xf]
  %v51 = vld [vmem:[%s3 + $0x58] sm:$0xf]
  %v52 = vld [vmem:[%s3 + $0x5c] sm:$0xf]
  %v53 = vld [vmem:[%s3 + $0x60] sm:$0xf]
  %v54 = vld [vmem:[%s3 + $0x64] sm:$0xf]
  %v55 = vld [vmem:[%s3 + $0x68] sm:$0xf]
  %v56 = vld [vmem:[%s3 + $0x6c] sm:$0xf]
  %v57 = vld [vmem:[%s3 + $0x70] sm:$0xf]
  %v58 = vld [vmem:[%s3 + $0x74] sm:$0xf]
  %v59 = vld [vmem:[%s3 + $0x78] sm:$0xf]
  %v60 = vld [vmem:[%s3 + $0x7c] sm:$0xf]
  %v61 = vld [vmem:[%s3 + $0x80] sm:$0xf]
  %v62 = vld [vmem:[%s3 + $0x84] sm:$0xf]
  %v63 = vld [vmem:[%s3 + $0x88] sm:$0xf]
  %v64 = vld [vmem:[%s3 + $0x8c] sm:$0xf]
  %v73 = vunpack.c.l.b16 %v21
  %v74 = vunpack.c.h.b16 %v21
  %v75 = vunpack.c.l.b16 %v22
  %v76 = vunpack.c.l.b16 %v23
  %v77 = vunpack.c.h.b16 %v23
  %v78 = vunpack.c.l.b16 %v24
  %v79 = vunpack.c.l.b16 %v25
  %v80 = vunpack.c.h.b16 %v25
  %v81 = vunpack.c.l.b16 %v26
  %v82 = vunpack.c.l.b16 %v27
  %v83 = vunpack.c.h.b16 %v27
  %v84 = vunpack.c.l.b16 %v28
  %v85 = vpack.c.b16 %v76, %v73
  %v86 = vpack.c.b16 %v77, %v74
  %v87 = vpack.c.b16 %v78, %v75
  %v88 = vpack.c.b16 %v82, %v79
  %v89 = vpack.c.b16 %v83, %v80
  %v90 = vpack.c.b16 %v84, %v81
  %v131 = vunpack.c.l.b16 %v29
  %v132 = vunpack.c.l.b16 %v30
  %v133 = vunpack.c.l.b16 %v31
  %v134 = vunpack.c.l.b16 %v32
  %v135 = vunpack.c.l.b16 %v33
  %v136 = vunpack.c.l.b16 %v34
  %v137 = vunpack.c.l.b16 %v35
  %v138 = vunpack.c.l.b16 %v36
  %v139 = vunpack.c.l.b16 %v37
  %v140 = vunpack.c.l.b16 %v38
  %v141 = vunpack.c.l.b16 %v39
  %v142 = vunpack.c.l.b16 %v40
  %v143 = vunpack.c.l.b16 %v41
  %v144 = vunpack.c.l.b16 %v42
  %v145 = vunpack.c.l.b16 %v43
  %v146 = vunpack.c.l.b16 %v44
  %v147 = vunpack.c.l.b16 %v45
  %v148 = vunpack.c.l.b16 %v46
  %v149 = vunpack.c.l.b16 %v47
  %v150 = vunpack.c.l.b16 %v48
  %v151 = vunpack.c.l.b16 %v49
  %v152 = vunpack.c.l.b16 %v50
  %v153 = vunpack.c.l.b16 %v51
  %v154 = vunpack.c.l.b16 %v52
  %v155 = vunpack.c.l.b16 %v53
  %v156 = vunpack.c.l.b16 %v54
  %v157 = vunpack.c.l.b16 %v55
  %v158 = vunpack.c.l.b16 %v56
  %v159 = vunpack.c.l.b16 %v57
  %v160 = vunpack.c.l.b16 %v58
  %v161 = vunpack.c.l.b16 %v59
  %v162 = vunpack.c.l.b16 %v60
  %v163 = vunpack.c.l.b16 %v61
  %v164 = vunpack.c.l.b16 %v62
  %v165 = vunpack.c.l.b16 %v63
  %v166 = vunpack.c.l.b16 %v64
  %v167 = vpack.c.b16 %v132, %v131
  %v168 = vpack.c.b16 %v134, %v133
  %v169 = vpack.c.b16 %v136, %v135
  %v170 = vpack.c.b16 %v138, %v137
  %v171 = vpack.c.b16 %v140, %v139
  %v172 = vpack.c.b16 %v142, %v141
  %v173 = vpack.c.b16 %v144, %v143
  %v174 = vpack.c.b16 %v146, %v145
  %v175 = vpack.c.b16 %v148, %v147
  %v176 = vpack.c.b16 %v150, %v149
  %v177 = vpack.c.b16 %v152, %v151
  %v178 = vpack.c.b16 %v154, %v153
  %v179 = vpack.c.b16 %v156, %v155
  %v180 = vpack.c.b16 %v158, %v157
  %v181 = vpack.c.b16 %v160, %v159
  %v182 = vpack.c.b16 %v162, %v161
  %v183 = vpack.c.b16 %v164, %v163
  %v184 = vpack.c.b16 %v166, %v165
  %vm203 = vcmask 261120
  %v205 = vsel %vm203, %v87, 0
  %v208 = vsel %vm203, %v90, 0
  %210 = vmatpush.bf16.msra.mxu0 %v174
  %211 = vmatpush.bf16.msra.mxu0 %v173
  %212 = vmatpush.bf16.msra.mxu0 %v172
  %213 = vmatpush.bf16.msra.mxu0 %v171
  %214 = vmatpush.bf16.msra.mxu0 %v170
  %215 = vmatpush.bf16.msra.mxu0 %v169
  %216 = vmatpush.bf16.msra.mxu0 %v168
  %217 = vmatpush.bf16.msra.mxu0 %v167
  %218 = vmatmul.bf16.gmra.mxu0 %v85
  %v219 = vpop.f32.mrf.mxu0
  %v220 = vadd.f32 0.0, %v219
  %v221 = vpop.f32.mrf.mxu0
  %v222 = vadd.f32 0.0, %v221
  %223 = vmatmul.bf16.gmra.mxu0 %v88
  %v224 = vpop.f32.mrf.mxu0
  %v225 = vadd.f32 0.0, %v224
  %v226 = vpop.f32.mrf.mxu0
  %v227 = vadd.f32 0.0, %v226
  %228 = vdwg.mxu0
  %229 = vmatpush.bf16.msra.mxu0 %v182
  %230 = vmatpush.bf16.msra.mxu0 %v181
  %231 = vmatpush.bf16.msra.mxu0 %v180
  %232 = vmatpush.bf16.msra.mxu0 %v179
  %233 = vmatpush.bf16.msra.mxu0 %v178
  %234 = vmatpush.bf16.msra.mxu0 %v177
  %235 = vmatpush.bf16.msra.mxu0 %v176
  %236 = vmatpush.bf16.msra.mxu0 %v175
  %237 = vmatmul.bf16.gmra.mxu0 %v86
  %v238 = vpop.f32.mrf.mxu0
  %v239 = vadd.f32 %v220, %v238
  %v240 = vpop.f32.mrf.mxu0
  %v241 = vadd.f32 %v222, %v240
  %242 = vmatmul.bf16.gmra.mxu0 %v89
  %v243 = vpop.f32.mrf.mxu0
  %v244 = vadd.f32 %v225, %v243
  %v245 = vpop.f32.mrf.mxu0
  %v246 = vadd.f32 %v227, %v245
  %247 = vdwg.mxu0
  %248 = vmatpush.bf16.msra.mxu0 0
  %249 = vmatpush.bf16.msra.mxu0 0
  %250 = vmatpush.bf16.msra.mxu0 0
  %251 = vmatpush.bf16.msra.mxu0 0
  %252 = vmatpush.bf16.msra.mxu0 0
  %253 = vmatpush.bf16.msra.mxu0 0
  %254 = vmatpush.bf16.msra.mxu0 %v184
  %255 = vmatpush.bf16.msra.mxu0 %v183
  %256 = vmatmul.bf16.gmra.mxu0 %v205
  %v257 = vpop.f32.mrf.mxu0
  %v258 = vadd.f32 %v239, %v257
  %v259 = vpop.f32.mrf.mxu0
  %v260 = vadd.f32 %v241, %v259
  %261 = vmatmul.bf16.gmra.mxu0 %v208
  %v262 = vpop.f32.mrf.mxu0
  %v263 = vadd.f32 %v244, %v262
  %v264 = vpop.f32.mrf.mxu0
  %v265 = vadd.f32 %v246, %v264
  %266 = vdwg.mxu0
  %v267 = vld [vmem:[%s1] sm:$0xff]
  %v268 = vld [vmem:[%s1 + $0x8] sm:$0xff]
  %v269 = vld [vmem:[%s1 + $0x10] sm:$0xff]
  %v270 = vld [vmem:[%s1 + $0x18] sm:$0xff]
  %272 = vset.pattern.permute.xlu0 0
  %273 = vperm.xlu0 %272, %v267
  %v274 = vpop.permute.xlu0 %273
  %277 = vset.pattern.permute.xlu0 0
  %278 = vperm.xlu0 %277, %v268
  %v279 = vpop.permute.xlu0 %278
  %282 = vset.pattern.permute.xlu0 0
  %283 = vperm.xlu0 %282, %v269
  %v284 = vpop.permute.xlu0 %283
  %287 = vset.pattern.permute.xlu0 0
  %288 = vperm.xlu0 %287, %v270
  %v289 = vpop.permute.xlu0 %288
  %v291 = vmul.f32 %v258, %v274
  %v292 = vmul.f32 %v260, %v279
  %v293 = vmul.f32 %v263, %v284
  %v294 = vmul.f32 %v265, %v289
  %v295 = vld [vmem:[%s2] sm:$0xff]
  %v296 = vld [vmem:[%s2 + $0x8] sm:$0xff]
  %v297 = vld [vmem:[%s2 + $0x10] sm:$0xff]
  %v298 = vld [vmem:[%s2 + $0x18] sm:$0xff]
  %300 = vset.pattern.permute.xlu0 0
  %301 = vperm.xlu0 %300, %v295
  %v302 = vpop.permute.xlu0 %301
  %305 = vset.pattern.permute.xlu0 0
  %306 = vperm.xlu0 %305, %v296
  %v307 = vpop.permute.xlu0 %306
  %310 = vset.pattern.permute.xlu0 0
  %311 = vperm.xlu0 %310, %v297
  %v312 = vpop.permute.xlu0 %311
  %315 = vset.pattern.permute.xlu0 0
  %316 = vperm.xlu0 %315, %v298
  %v317 = vpop.permute.xlu0 %316
  %v319 = vadd.f32 %v291, %v302
  %v320 = vadd.f32 %v292, %v307
  %v321 = vadd.f32 %v293, %v312
  %v322 = vadd.f32 %v294, %v317
  %v323 = vld [vmem:[%s4] sm:$0xff]
  %v324 = vld [vmem:[%s4 + $0x8] sm:$0xff]
  %v325 = vld [vmem:[%s4 + $0x10] sm:$0xff]
  %v326 = vld [vmem:[%s4 + $0x18] sm:$0xff]
  %v327 = vadd.f32 %v319, %v323
  %v328 = vadd.f32 %v320, %v324
  %v329 = vadd.f32 %v321, %v325
  %v330 = vadd.f32 %v322, %v326
  %vm331 = vcmp.gt.f32.partialorder %v327, 0.0
  %vm332 = vcmp.gt.f32.partialorder %v328, 0.0
  %vm333 = vcmp.gt.f32.partialorder %v329, 0.0
  %vm334 = vcmp.gt.f32.partialorder %v330, 0.0
  %v335 = vmul.f32 %v327, 0.2
  %v336 = vmul.f32 %v328, 0.2
  %v337 = vmul.f32 %v329, 0.2
  %v338 = vmul.f32 %v330, 0.2
  %v339 = vsel %vm331, %v327, %v335
  %v340 = vsel %vm332, %v328, %v336
  %v341 = vsel %vm333, %v329, %v337
  %v342 = vsel %vm334, %v330, %v338
  %343 = vst [vmem:[%s5] sm:$0xff] %v339
  %344 = vst [vmem:[%s5 + $0x8] sm:$0xff] %v340
  %345 = vst [vmem:[%s5 + $0x10] sm:$0xff] %v341
  %346 = vst [vmem:[%s5 + $0x18] sm:$0xff] %v342
  // Predicated region
  $region22: #{feature_extractor_pallas.18} parent=0 // pred_check
    _
  $region23: #{feature_extractor_pallas.18} parent=0 // pred_check_branch
    %348 = sbr.rel (0) target = $region25
  $region24: #{feature_extractor_pallas.18} parent=0 // pred_region
    _
  $region25: #{feature_extractor_pallas.18} parent=0 // pred_fallthru
    _
  // Predicated region
  $region26: #{feature_extractor_pallas.18} parent=0 // pred_check
    _
  $region27: #{feature_extractor_pallas.18} parent=0 // pred_check_branch
    %350 = sbr.rel (0) target = $region29
  $region28: #{feature_extractor_pallas.18} parent=0 // pred_region
    _
  $region29: #{feature_extractor_pallas.18} parent=0 // pred_fallthru
    _

</llo_original>
